<compile_context>
chip_gen: v7x
topology: tpu7x:2x2x1
jax: 0.10.0
libtpu: 0.0.40
codegen_flags: <defaults>
</compile_context>

<pallas_src>
import math
import functools

import numpy as np
import jax
import jax.numpy as jnp
from jax.experimental import pallas as pl
from jax.experimental.pallas import tpu as pltpu

LN_EPS = 1e-12  # BertLayerNorm eps


# ----------------------------- kernel helpers -----------------------------

def _gelu(x):
    # TODO(synk): BERT's 'gelu' is the exact erf form; tanh approximation used
    # here for guaranteed Mosaic lowering (max abs error ~3e-4).
    c = math.sqrt(2.0 / math.pi)
    return 0.5 * x * (1.0 + jnp.tanh(c * (x + 0.044715 * x * x * x)))


# --------------------------- fused BertLayer stack --------------------------

def bert_stack_kernel(x_ref, wqkv_ref, wo_ref, wi_ref, w2_ref, vec_ref,
                      out_ref, *, num_heads, c_real, mask_mode):
    """Grid = (batch_tile, layer). One batch tile, one BertLayer per step.

    The output block (Bt, T, CP) is the layer-resident activation: its block
    index is constant along the layer axis, so it stays in VMEM and is only
    written back to HBM when the batch tile changes / the grid ends.
    Channel dims are zero-padded to 128-lane multiples; padded lanes stay
    exactly zero so LayerNorm statistics over the real C channels are exact.
    """
    l = pl.program_id(1)
    Bt, T, CP = out_ref.shape
    H = num_heads
    dh = c_real // H
    QKVP = wqkv_ref.shape[2]
    IP = wi_ref.shape[2]
    M = Bt * T

    @pl.when(l == 0)
    def _():
        out_ref[...] = x_ref[...]

    x = out_ref[...].reshape(M, CP)            # (Bt*T, CP) f32, padded lanes == 0
    vec = vec_ref[0]                           # (8, W) packed per-layer vectors

    # Lane-validity mask for LayerNorm over the real C channels only.
    lane = jax.lax.broadcasted_iota(jnp.int32, (M, CP), 1)
    valid = lane < c_real
    inv_c = 1.0 / c_real

    def layernorm(y, gamma, beta):
        mu = jnp.sum(y, axis=-1, keepdims=True) * inv_c        # pads contribute 0
        d = jnp.where(valid, y - mu, jnp.float32(0.0))
        var = jnp.sum(d * d, axis=-1, keepdims=True) * inv_c
        return d * jax.lax.rsqrt(var + LN_EPS) * gamma + beta  # pads stay 0

    # ---- fused QKV projection on the flattened batch*seq rows ----
    qkv = jnp.dot(x.astype(jnp.bfloat16), wqkv_ref[0],
                  preferred_element_type=jnp.float32)          # (M, QKVP) f32
    qkv = (qkv + vec[0:1, :QKVP]).astype(jnp.bfloat16)         # cast once

    # ---- additive attention mask, generated in-kernel ----
    if mask_mode is None:
        mask = None
    else:
        row = jax.lax.broadcasted_iota(jnp.int32, (T, T), 0)
        col = jax.lax.broadcasted_iota(jnp.int32, (T, T), 1)
        banned = (col > row) if mask_mode == 'fwd' else (col < row)
        mask = jnp.where(banned, jnp.float32(-10000.0), jnp.float32(0.0))

    # ---- attention: per sequence / head; each head's context is folded
    #      immediately into the output-projection accumulator (no concat). ----
    # TODO(synk): convert to lax.fori_loop if H or T grows (bounds live ranges).
    wo = wo_ref[0]                                             # (CP, CP) bf16
    attn_rows = []
    for b in range(Bt):                                        # static, small
        qkv_b = qkv[b * T:(b + 1) * T]                         # (T, QKVP) bf16
        acc_b = jnp.zeros((T, CP), jnp.float32)
        for h in range(H):                                     # static, small
            qh = qkv_b[:, h * dh:(h + 1) * dh]                 # (T, dh) pre-scaled
            kh = qkv_b[:, c_real + h * dh:c_real + (h + 1) * dh]
            vh = qkv_b[:, 2 * c_real + h * dh:2 * c_real + (h + 1) * dh]
            s = jax.lax.dot_general(qh, kh, (((1,), (1,)), ((), ())),
                                    preferred_element_type=jnp.float32)   # (T,T)
            if mask is not None:
                s = s + mask
            s = s - jnp.max(s, axis=-1, keepdims=True)
            p = jnp.exp(s)
            p = p * pl.reciprocal(jnp.sum(p, axis=-1, keepdims=True), approx=True)
            ctx = jnp.dot(p.astype(jnp.bfloat16), vh,
                          preferred_element_type=jnp.float32)             # (T,dh)
            acc_b = acc_b + jnp.dot(ctx.astype(jnp.bfloat16),
                                    wo[h * dh:(h + 1) * dh, :],
                                    preferred_element_type=jnp.float32)   # (T,CP)
        attn_rows.append(acc_b)
    attn = attn_rows[0] if Bt == 1 else jnp.concatenate(attn_rows, axis=0)
    attn = attn + vec[1:2, :CP]                                # bo

    # ---- BertSelfOutput: residual + LayerNorm (dropout = identity) ----
    h1 = layernorm(attn + x, vec[2:3, :CP], vec[3:4, :CP])

    # ---- BertIntermediate (gelu) + BertOutput (residual + LayerNorm) ----
    inter = _gelu(jnp.dot(h1.astype(jnp.bfloat16), wi_ref[0],
                          preferred_element_type=jnp.float32) + vec[4:5, :IP])
    ffn = jnp.dot(inter.astype(jnp.bfloat16), w2_ref[0],
                  preferred_element_type=jnp.float32) + vec[5:6, :CP]
    h2 = layernorm(ffn + h1, vec[6:7, :CP], vec[7:8, :CP])

    out_ref[...] = h2.reshape(Bt, T, CP)


def _vmem_capacity_bytes():
    try:
        info = pltpu.get_tpu_info()
        cap = getattr(info, "vmem_capacity_bytes", None)
        if cap:
            return int(cap)
    except Exception:
        pass
    return 64 * 1024 * 1024    # conservative (v7x per-TC)


def bert_stack(x_btc_padded, pk, *, num_heads, c_real, mask_mode,
               batch_tile=None):
    """Run a whole stack of BertLayers: (B, T, CP) f32 -> (B, T, CP) f32."""
    B, T, CP = x_btc_padded.shape
    L, _, QKVP = pk['wqkv'].shape
    IP = pk['wi'].shape[2]
    W = pk['vec'].shape[2]

    Bt = B if batch_tile is None else batch_tile
    assert B % Bt == 0, "batch_tile must divide batch"
    nb = B // Bt

    # Generation-aware VMEM budget: double-buffered blocks + intermediates + headroom.
    wbytes = 2 * (CP * QKVP + CP * CP + CP * IP + IP * CP) + 4 * 8 * W     # bf16 weights + f32 vec
    abytes = 4 * Bt * T * CP * 2                                           # x + out blocks (f32)
    ibytes = 4 * Bt * T * (QKVP + IP + 4 * CP)                             # in-kernel temporaries
    want = 2 * (wbytes + abytes) + ibytes + (8 << 20)
    vmem_limit = int(min(max(want, 32 << 20), int(0.75 * _vmem_capacity_bytes())))

    in_specs = [
        pl.BlockSpec((Bt, T, CP), lambda b, l: (b, 0, 0)),     # x (fetched once per batch tile)
        pl.BlockSpec((1, CP, QKVP), lambda b, l: (l, 0, 0)),   # packed QKV weights (Q pre-scaled)
        pl.BlockSpec((1, CP, CP), lambda b, l: (l, 0, 0)),     # attention output projection
        pl.BlockSpec((1, CP, IP), lambda b, l: (l, 0, 0)),     # intermediate (C -> 2C)
        pl.BlockSpec((1, IP, CP), lambda b, l: (l, 0, 0)),     # FFN output   (2C -> C)
        pl.BlockSpec((1, 8, W), lambda b, l: (l, 0, 0)),       # stacked biases / LN params
    ]
    out_spec = pl.BlockSpec((Bt, T, CP), lambda b, l: (b, 0, 0))

    kernel = functools.partial(bert_stack_kernel, num_heads=num_heads,
                               c_real=c_real, mask_mode=mask_mode)
    return pl.pallas_call(
        kernel,
        out_shape=jax.ShapeDtypeStruct((B, T, CP), jnp.float32),
        grid=(nb, L),
        in_specs=in_specs,
        out_specs=out_spec,
        compiler_params=pltpu.CompilerParams(
            dimension_semantics=("parallel", "arbitrary"),
            vmem_limit_bytes=vmem_limit),
    )(x_btc_padded, pk['wqkv'], pk['wo'], pk['wi'], pk['w2'], pk['vec'])


# ------------------------------ params / packing ----------------------------

def _linear_init(key, fan_in, fan_out):
    kw, kb = jax.random.split(key)
    bound = 1.0 / math.sqrt(fan_in)
    w = jax.random.uniform(kw, (fan_in, fan_out), jnp.float32, -bound, bound)
    b = jax.random.uniform(kb, (fan_out,), jnp.float32, -bound, bound)
    return w, b


def _init_layer(key, C):
    I = 2 * C  # intermediate_size = hidden_size * 2
    ks = jax.random.split(key, 6)
    wq, bq = _linear_init(ks[0], C, C)
    wk, bk = _linear_init(ks[1], C, C)
    wv, bv = _linear_init(ks[2], C, C)
    wo, bo = _linear_init(ks[3], C, C)
    wi, bi = _linear_init(ks[4], C, I)
    w2, b2 = _linear_init(ks[5], I, C)
    ones = jnp.ones((C,), jnp.float32)
    zeros = jnp.zeros((C,), jnp.float32)
    return dict(wq=wq, bq=bq, wk=wk, bk=bk, wv=wv, bv=bv, wo=wo, bo=bo,
                g1=ones, be1=zeros, wi=wi, bi=bi, w2=w2, b2=b2,
                g2=ones, be2=zeros)


def _rup(n, m=128):
    return ((n + m - 1) // m) * m


def _pack_layers(layers, C, H):
    """Pad/pack logical per-layer params into lane-dense, layer-stacked arrays
    (weights in bf16, biases/LN params in a single stacked f32 array).
    No per-head padding: Q/K/V packed at real width within a 128-padded total.
    """
    dh = C // H
    I = 2 * C
    CP = _rup(C)
    IP = _rup(I)
    QKVP = _rup(3 * C)
    W = max(QKVP, IP, CP)
    L = len(layers)
    scale = 1.0 / math.sqrt(dh)

    wqkv = np.zeros((L, CP, QKVP), np.float32)
    wo = np.zeros((L, CP, CP), np.float32)
    wi = np.zeros((L, CP, IP), np.float32)
    w2 = np.zeros((L, IP, CP), np.float32)
    vec = np.zeros((L, 8, W), np.float32)   # rows: bqkv, bo, g1, be1, bi, b2, g2, be2

    for li, lp in enumerate(layers):
        a = {k: np.asarray(v, np.float32) for k, v in lp.items()}
        wqkv[li, :C, 0:C] = a['wq'] * scale          # 1/sqrt(dh) folded into Q
        wqkv[li, :C, C:2 * C] = a['wk']
        wqkv[li, :C, 2 * C:3 * C] = a['wv']
        wo[li, :C, :C] = a['wo']
        wi[li, :C, :I] = a['wi']
        w2[li, :I, :C] = a['w2']
        vec[li, 0, 0:C] = a['bq'] * scale
        vec[li, 0, C:2 * C] = a['bk']
        vec[li, 0, 2 * C:3 * C] = a['bv']
        vec[li, 1, :C] = a['bo']
        vec[li, 2, :C] = a['g1']
        vec[li, 3, :C] = a['be1']
        vec[li, 4, :I] = a['bi']
        vec[li, 5, :C] = a['b2']
        vec[li, 6, :C] = a['g2']
        vec[li, 7, :C] = a['be2']

    # Padded-channel-zero invariant (LayerNorm correctness depends on it).
    assert np.all(vec[:, 0, 3 * C:] == 0.0)
    assert np.all(vec[:, 4, I:] == 0.0)
    assert np.all(vec[:, [1, 2, 3, 5, 6, 7], C:] == 0.0)
    assert np.all(wqkv[:, :, 3 * C:] == 0.0) and np.all(wo[:, :, C:] == 0.0)
    assert np.all(wi[:, :, I:] == 0.0) and np.all(w2[:, :, C:] == 0.0)

    bf = lambda x: jnp.asarray(x, jnp.bfloat16)
    return dict(wqkv=bf(wqkv), wo=bf(wo), wi=bf(wi), w2=bf(w2),
                vec=jnp.asarray(vec, jnp.float32))


def init_transformer(key, input_size, num_layers, max_seq_len, num_heads,
                     causal, bidirectional):
    assert input_size % num_heads == 0, "hidden size must divide num_heads"
    kpos, kf, kb = jax.random.split(key, 3)
    fwd_layers = [_init_layer(k, input_size) for k in jax.random.split(kf, num_layers)]
    params = {
        'pos_emb': jax.random.normal(kpos, (max_seq_len, input_size), jnp.float32),
        'fwd': _pack_layers(fwd_layers, input_size, num_heads),
        'bwd': None,
    }
    if bidirectional and causal:
        bwd_layers = [_init_layer(k, input_size) for k in jax.random.split(kb, num_layers)]
        params['bwd'] = _pack_layers(bwd_layers, input_size, num_heads)
    return params


# --------------------------------- forward ----------------------------------

def transformer_forward(params, x_bct, *, num_heads, causal=True,
                        bidirectional=False):
    """x_bct: (B, C, T) like the PyTorch module; returns (B, C, T) or (B, 2C, T)."""
    B, C, T = x_bct.shape
    assert T <= params['pos_emb'].shape[0], "seq len exceeds max_seq_len"
    CP = params['fwd']['wi'].shape[1]

    pos = params['pos_emb'][:T]                          # (T, C)
    h0 = jnp.transpose(x_bct, (0, 2, 1)) + pos[None]     # (B, T, C)
    h0p = jnp.pad(h0, ((0, 0), (0, 0), (0, CP - C)))     # lane-dense (B, T, CP)

    fwd = bert_stack(h0p, params['fwd'], num_heads=num_heads, c_real=C,
                     mask_mode='fwd' if causal else None)
    fwd = jnp.transpose(fwd[:, :, :C], (0, 2, 1))        # back to NCT

    if params['bwd'] is None:
        return fwd

    bwd = bert_stack(h0p, params['bwd'], num_heads=num_heads, c_real=C,
                     mask_mode='bwd')
    bwd = jnp.transpose(bwd[:, :, :C], (0, 2, 1))
    return jnp.concatenate([fwd, bwd], axis=1)


# ----------------------------------- main -----------------------------------

if __name__ == "__main__":
    key = jax.random.PRNGKey(0)
    B, C, T = 2, 32, 16                       # batch, hidden (input_size), seq len
    num_layers, num_heads, max_seq_len = 3, 4, 32

    kx, kp = jax.random.split(key)
    x = jax.random.normal(kx, (B, C, T), jnp.float32)    # PyTorch NCT input

    params = init_transformer(kp, C, num_layers, max_seq_len, num_heads,
                              causal=True, bidirectional=False)
    out = transformer_forward(params, x, num_heads=num_heads,
                              causal=True, bidirectional=False)
    jax.block_until_ready(out)
    assert out.shape == (B, C, T), out.shape
    assert bool(jnp.all(jnp.isfinite(out)))
    print("KERNEL_OK")
</pallas_src>

<mosaic_0001>
module attributes {stable_mosaic.version = 11 : i64} {
  func.func @bert_stack_kernel(%arg0: i32, %arg1: i32, %arg2: memref<2x16x128xf32, #tpu.memory_space<vmem>>, %arg3: memref<1x128x128xbf16, #tpu.memory_space<vmem>>, %arg4: memref<1x128x128xbf16, #tpu.memory_space<vmem>>, %arg5: memref<1x128x128xbf16, #tpu.memory_space<vmem>>, %arg6: memref<1x128x128xbf16, #tpu.memory_space<vmem>>, %arg7: memref<1x8x128xf32, #tpu.memory_space<vmem>>, %arg8: memref<2x16x128xf32, #tpu.memory_space<vmem>>) attributes {dimension_semantics = [#tpu.dimension_semantics<parallel>, #tpu.dimension_semantics<arbitrary>], iteration_bounds = array<i64: 1, 3>, scalar_prefetch = 0 : i64, scratch_operands = 0 : i64, tpu.core_type = #tpu.core_type<tc>, window_params = [{transform_indices = @transform_0, window_bounds = array<i64: 2, 16, 128>}, {transform_indices = @transform_1, window_bounds = array<i64: 1, 128, 128>}, {transform_indices = @transform_2, window_bounds = array<i64: 1, 128, 128>}, {transform_indices = @transform_3, window_bounds = array<i64: 1, 128, 128>}, {transform_indices = @transform_4, window_bounds = array<i64: 1, 128, 128>}, {transform_indices = @transform_5, window_bounds = array<i64: 1, 8, 128>}, {transform_indices = @transform_6, window_bounds = array<i64: 2, 16, 128>}]} {
    %c0_i32 = arith.constant 0 : i32
    %0 = arith.cmpi eq, %arg1, %c0_i32 : i32
    %1 = arith.extui %0 : i1 to i32
    %c0_i32_0 = arith.constant 0 : i32
    %2 = arith.cmpi ne, %1, %c0_i32_0 : i32
    scf.if %2 {
      %c0_83 = arith.constant 0 : index
      %c0_84 = arith.constant 0 : index
      %c0_85 = arith.constant 0 : index
      %281 = vector.load %arg2[%c0_83, %c0_84, %c0_85] : memref<2x16x128xf32, #tpu.memory_space<vmem>>, vector<2x16x128xf32>
      %c0_86 = arith.constant 0 : index
      %c0_87 = arith.constant 0 : index
      %c0_88 = arith.constant 0 : index
      %282 = vector.load %arg8[%c0_86, %c0_87, %c0_88] : memref<2x16x128xf32, #tpu.memory_space<vmem>>, vector<2x16x128xf32>
      tpu.vector_store %arg8[%c0_86, %c0_87, %c0_88], %281 {strides = array<i32>} : memref<2x16x128xf32, #tpu.memory_space<vmem>>, vector<2x16x128xf32>,
    } else {
    }
    %c0 = arith.constant 0 : index
    %c0_1 = arith.constant 0 : index
    %c0_2 = arith.constant 0 : index
    %3 = vector.load %arg8[%c0, %c0_1, %c0_2] : memref<2x16x128xf32, #tpu.memory_space<vmem>>, vector<2x16x128xf32>
    %4 = vector.shape_cast %3 : vector<2x16x128xf32> to vector<32x128xf32>
    %c0_3 = arith.constant 0 : index
    %c0_4 = arith.constant 0 : index
    %c0_5 = arith.constant 0 : index
    %5 = vector.load %arg7[%c0_3, %c0_4, %c0_5] : memref<1x8x128xf32, #tpu.memory_space<vmem>>, vector<1x8x128xf32>
    %6 = vector.shape_cast %5 : vector<1x8x128xf32> to vector<8x128xf32>
    %7 = tpu.iota {dimensions = array<i32: 1>} : vector<32x128xi32>
    %c32_i32 = arith.constant 32 : i32
    %8 = vector.broadcast %c32_i32 : i32 to vector<32x128xi32>
    %9 = arith.cmpi slt, %7, %8 : vector<32x128xi32>
    %10 = arith.truncf %4 : vector<32x128xf32> to vector<32x128xbf16>
    %c0_6 = arith.constant 0 : index
    %c0_7 = arith.constant 0 : index
    %c0_8 = arith.constant 0 : index
    %11 = vector.load %arg3[%c0_6, %c0_7, %c0_8] : memref<1x128x128xbf16, #tpu.memory_space<vmem>>, vector<1x128x128xbf16>
    %12 = vector.shape_cast %11 : vector<1x128x128xbf16> to vector<128x128xbf16>
    %cst = arith.constant dense<0.000000e+00> : vector<32x128xf32>
    %13 = tpu.matmul %10, %12, %cst {dimension_numbers = #tpu.dot_dimension_numbers<[1], [0], [0], [1], [0, 0, 1, 1], [], []>} : vector<32x128xbf16>, vector<128x128xbf16>, vector<32x128xf32> -> vector<32x128xf32>
    %14 = vector.extract_strided_slice %6 {offsets = [0, 0], sizes = [1, 128], strides = [1, 1]} : vector<8x128xf32> to vector<1x128xf32>
    %15 = vector.broadcast %14 : vector<1x128xf32> to vector<32x128xf32>
    %16 = arith.addf %13, %15 : vector<32x128xf32>
    %17 = arith.truncf %16 : vector<32x128xf32> to vector<32x128xbf16>
    %18 = tpu.iota {dimensions = array<i32: 0>} : vector<16x16xi32>
    %19 = tpu.iota {dimensions = array<i32: 1>} : vector<16x16xi32>
    %20 = arith.cmpi sgt, %19, %18 : vector<16x16xi32>
    %cst_9 = arith.constant -1.000000e+04 : f32
    %cst_10 = arith.constant 0.000000e+00 : f32
    %21 = vector.broadcast %cst_9 : f32 to vector<16x16xf32>
    %22 = vector.broadcast %cst_10 : f32 to vector<16x16xf32>
    %23 = arith.select %20, %21, %22 : vector<16x16xi1>, vector<16x16xf32>
    %c0_11 = arith.constant 0 : index
    %c0_12 = arith.constant 0 : index
    %c0_13 = arith.constant 0 : index
    %24 = vector.load %arg4[%c0_11, %c0_12, %c0_13] : memref<1x128x128xbf16, #tpu.memory_space<vmem>>, vector<1x128x128xbf16>
    %25 = vector.shape_cast %24 : vector<1x128x128xbf16> to vector<128x128xbf16>
    %26 = vector.extract_strided_slice %17 {offsets = [0, 0], sizes = [16, 128], strides = [1, 1]} : vector<32x128xbf16> to vector<16x128xbf16>
    %cst_14 = arith.constant 0.000000e+00 : f32
    %27 = vector.broadcast %cst_14 : f32 to vector<16x128xf32>
    %28 = vector.extract_strided_slice %26 {offsets = [0, 0], sizes = [16, 8], strides = [1, 1]} : vector<16x128xbf16> to vector<16x8xbf16>
    %29 = vector.extract_strided_slice %26 {offsets = [0, 32], sizes = [16, 8], strides = [1, 1]} : vector<16x128xbf16> to vector<16x8xbf16>
    %30 = vector.extract_strided_slice %26 {offsets = [0, 64], sizes = [16, 8], strides = [1, 1]} : vector<16x128xbf16> to vector<16x8xbf16>
    %cst_15 = arith.constant dense<0.000000e+00> : vector<16x16xf32>
    %31 = tpu.matmul %28, %29, %cst_15 {dimension_numbers = #tpu.dot_dimension_numbers<[1], [1], [0], [0], [0, 0, 1, 0], [], []>} : vector<16x8xbf16>, vector<16x8xbf16>, vector<16x16xf32> -> vector<16x16xf32>
    %32 = arith.addf %31, %23 : vector<16x16xf32>
    %cst_16 = arith.constant dense<0xFF800000> : vector<16xf32>
    %33 = vector.multi_reduction <maximumf>, %32, %cst_16 [1] : vector<16x16xf32> to vector<16xf32>
    %34 = vector.shape_cast %33 : vector<16xf32> to vector<16x1xf32>
    %35 = vector.broadcast %34 : vector<16x1xf32> to vector<16x16xf32>
    %36 = arith.subf %32, %35 : vector<16x16xf32>
    %37 = math.exp %36 : vector<16x16xf32>
    %cst_17 = arith.constant dense<0.000000e+00> : vector<16xf32>
    %38 = vector.multi_reduction <add>, %37, %cst_17 [1] : vector<16x16xf32> to vector<16xf32>
    %39 = vector.shape_cast %38 : vector<16xf32> to vector<16x1xf32>
    %40 = tpu.reciprocal %39 {approx = true} : vector<16x1xf32> -> vector<16x1xf32>
    %41 = vector.broadcast %40 : vector<16x1xf32> to vector<16x16xf32>
    %42 = arith.mulf %37, %41 : vector<16x16xf32>
    %43 = arith.truncf %42 : vector<16x16xf32> to vector<16x16xbf16>
    %cst_18 = arith.constant dense<0.000000e+00> : vector<16x8xf32>
    %44 = tpu.matmul %43, %30, %cst_18 {dimension_numbers = #tpu.dot_dimension_numbers<[1], [0], [0], [1], [0, 0, 1, 1], [], []>} : vector<16x16xbf16>, vector<16x8xbf16>, vector<16x8xf32> -> vector<16x8xf32>
    %45 = arith.truncf %44 : vector<16x8xf32> to vector<16x8xbf16>
    %46 = vector.extract_strided_slice %25 {offsets = [0, 0], sizes = [8, 128], strides = [1, 1]} : vector<128x128xbf16> to vector<8x128xbf16>
    %cst_19 = arith.constant dense<0.000000e+00> : vector<16x128xf32>
    %47 = tpu.matmul %45, %46, %cst_19 {dimension_numbers = #tpu.dot_dimension_numbers<[1], [0], [0], [1], [0, 0, 1, 1], [], []>} : vector<16x8xbf16>, vector<8x128xbf16>, vector<16x128xf32> -> vector<16x128xf32>
    %48 = arith.addf %27, %47 : vector<16x128xf32>
    %49 = vector.extract_strided_slice %26 {offsets = [0, 8], sizes = [16, 8], strides = [1, 1]} : vector<16x128xbf16> to vector<16x8xbf16>
    %50 = vector.extract_strided_slice %26 {offsets = [0, 40], sizes = [16, 8], strides = [1, 1]} : vector<16x128xbf16> to vector<16x8xbf16>
    %51 = vector.extract_strided_slice %26 {offsets = [0, 72], sizes = [16, 8], strides = [1, 1]} : vector<16x128xbf16> to vector<16x8xbf16>
    %cst_20 = arith.constant dense<0.000000e+00> : vector<16x16xf32>
    %52 = tpu.matmul %49, %50, %cst_20 {dimension_numbers = #tpu.dot_dimension_numbers<[1], [1], [0], [0], [0, 0, 1, 0], [], []>} : vector<16x8xbf16>, vector<16x8xbf16>, vector<16x16xf32> -> vector<16x16xf32>
    %53 = arith.addf %52, %23 : vector<16x16xf32>
    %cst_21 = arith.constant dense<0xFF800000> : vector<16xf32>
    %54 = vector.multi_reduction <maximumf>, %53, %cst_21 [1] : vector<16x16xf32> to vector<16xf32>
    %55 = vector.shape_cast %54 : vector<16xf32> to vector<16x1xf32>
    %56 = vector.broadcast %55 : vector<16x1xf32> to vector<16x16xf32>
    %57 = arith.subf %53, %56 : vector<16x16xf32>
    %58 = math.exp %57 : vector<16x16xf32>
    %cst_22 = arith.constant dense<0.000000e+00> : vector<16xf32>
    %59 = vector.multi_reduction <add>, %58, %cst_22 [1] : vector<16x16xf32> to vector<16xf32>
    %60 = vector.shape_cast %59 : vector<16xf32> to vector<16x1xf32>
    %61 = tpu.reciprocal %60 {approx = true} : vector<16x1xf32> -> vector<16x1xf32>
    %62 = vector.broadcast %61 : vector<16x1xf32> to vector<16x16xf32>
    %63 = arith.mulf %58, %62 : vector<16x16xf32>
    %64 = arith.truncf %63 : vector<16x16xf32> to vector<16x16xbf16>
    %cst_23 = arith.constant dense<0.000000e+00> : vector<16x8xf32>
    %65 = tpu.matmul %64, %51, %cst_23 {dimension_numbers = #tpu.dot_dimension_numbers<[1], [0], [0], [1], [0, 0, 1, 1], [], []>} : vector<16x16xbf16>, vector<16x8xbf16>, vector<16x8xf32> -> vector<16x8xf32>
    %66 = arith.truncf %65 : vector<16x8xf32> to vector<16x8xbf16>
    %67 = vector.extract_strided_slice %25 {offsets = [8, 0], sizes = [8, 128], strides = [1, 1]} : vector<128x128xbf16> to vector<8x128xbf16>
    %cst_24 = arith.constant dense<0.000000e+00> : vector<16x128xf32>
    %68 = tpu.matmul %66, %67, %cst_24 {dimension_numbers = #tpu.dot_dimension_numbers<[1], [0], [0], [1], [0, 0, 1, 1], [], []>} : vector<16x8xbf16>, vector<8x128xbf16>, vector<16x128xf32> -> vector<16x128xf32>
    %69 = arith.addf %48, %68 : vector<16x128xf32>
    %70 = vector.extract_strided_slice %26 {offsets = [0, 16], sizes = [16, 8], strides = [1, 1]} : vector<16x128xbf16> to vector<16x8xbf16>
    %71 = vector.extract_strided_slice %26 {offsets = [0, 48], sizes = [16, 8], strides = [1, 1]} : vector<16x128xbf16> to vector<16x8xbf16>
    %72 = vector.extract_strided_slice %26 {offsets = [0, 80], sizes = [16, 8], strides = [1, 1]} : vector<16x128xbf16> to vector<16x8xbf16>
    %cst_25 = arith.constant dense<0.000000e+00> : vector<16x16xf32>
    %73 = tpu.matmul %70, %71, %cst_25 {dimension_numbers = #tpu.dot_dimension_numbers<[1], [1], [0], [0], [0, 0, 1, 0], [], []>} : vector<16x8xbf16>, vector<16x8xbf16>, vector<16x16xf32> -> vector<16x16xf32>
    %74 = arith.addf %73, %23 : vector<16x16xf32>
    %cst_26 = arith.constant dense<0xFF800000> : vector<16xf32>
    %75 = vector.multi_reduction <maximumf>, %74, %cst_26 [1] : vector<16x16xf32> to vector<16xf32>
    %76 = vector.shape_cast %75 : vector<16xf32> to vector<16x1xf32>
    %77 = vector.broadcast %76 : vector<16x1xf32> to vector<16x16xf32>
    %78 = arith.subf %74, %77 : vector<16x16xf32>
    %79 = math.exp %78 : vector<16x16xf32>
    %cst_27 = arith.constant dense<0.000000e+00> : vector<16xf32>
    %80 = vector.multi_reduction <add>, %79, %cst_27 [1] : vector<16x16xf32> to vector<16xf32>
    %81 = vector.shape_cast %80 : vector<16xf32> to vector<16x1xf32>
    %82 = tpu.reciprocal %81 {approx = true} : vector<16x1xf32> -> vector<16x1xf32>
    %83 = vector.broadcast %82 : vector<16x1xf32> to vector<16x16xf32>
    %84 = arith.mulf %79, %83 : vector<16x16xf32>
    %85 = arith.truncf %84 : vector<16x16xf32> to vector<16x16xbf16>
    %cst_28 = arith.constant dense<0.000000e+00> : vector<16x8xf32>
    %86 = tpu.matmul %85, %72, %cst_28 {dimension_numbers = #tpu.dot_dimension_numbers<[1], [0], [0], [1], [0, 0, 1, 1], [], []>} : vector<16x16xbf16>, vector<16x8xbf16>, vector<16x8xf32> -> vector<16x8xf32>
    %87 = arith.truncf %86 : vector<16x8xf32> to vector<16x8xbf16>
    %88 = vector.extract_strided_slice %25 {offsets = [16, 0], sizes = [8, 128], strides = [1, 1]} : vector<128x128xbf16> to vector<8x128xbf16>
    %cst_29 = arith.constant dense<0.000000e+00> : vector<16x128xf32>
    %89 = tpu.matmul %87, %88, %cst_29 {dimension_numbers = #tpu.dot_dimension_numbers<[1], [0], [0], [1], [0, 0, 1, 1], [], []>} : vector<16x8xbf16>, vector<8x128xbf16>, vector<16x128xf32> -> vector<16x128xf32>
    %90 = arith.addf %69, %89 : vector<16x128xf32>
    %91 = vector.extract_strided_slice %26 {offsets = [0, 24], sizes = [16, 8], strides = [1, 1]} : vector<16x128xbf16> to vector<16x8xbf16>
    %92 = vector.extract_strided_slice %26 {offsets = [0, 56], sizes = [16, 8], strides = [1, 1]} : vector<16x128xbf16> to vector<16x8xbf16>
    %93 = vector.extract_strided_slice %26 {offsets = [0, 88], sizes = [16, 8], strides = [1, 1]} : vector<16x128xbf16> to vector<16x8xbf16>
    %cst_30 = arith.constant dense<0.000000e+00> : vector<16x16xf32>
    %94 = tpu.matmul %91, %92, %cst_30 {dimension_numbers = #tpu.dot_dimension_numbers<[1], [1], [0], [0], [0, 0, 1, 0], [], []>} : vector<16x8xbf16>, vector<16x8xbf16>, vector<16x16xf32> -> vector<16x16xf32>
    %95 = arith.addf %94, %23 : vector<16x16xf32>
    %cst_31 = arith.constant dense<0xFF800000> : vector<16xf32>
    %96 = vector.multi_reduction <maximumf>, %95, %cst_31 [1] : vector<16x16xf32> to vector<16xf32>
    %97 = vector.shape_cast %96 : vector<16xf32> to vector<16x1xf32>
    %98 = vector.broadcast %97 : vector<16x1xf32> to vector<16x16xf32>
    %99 = arith.subf %95, %98 : vector<16x16xf32>
    %100 = math.exp %99 : vector<16x16xf32>
    %cst_32 = arith.constant dense<0.000000e+00> : vector<16xf32>
    %101 = vector.multi_reduction <add>, %100, %cst_32 [1] : vector<16x16xf32> to vector<16xf32>
    %102 = vector.shape_cast %101 : vector<16xf32> to vector<16x1xf32>
    %103 = tpu.reciprocal %102 {approx = true} : vector<16x1xf32> -> vector<16x1xf32>
    %104 = vector.broadcast %103 : vector<16x1xf32> to vector<16x16xf32>
    %105 = arith.mulf %100, %104 : vector<16x16xf32>
    %106 = arith.truncf %105 : vector<16x16xf32> to vector<16x16xbf16>
    %cst_33 = arith.constant dense<0.000000e+00> : vector<16x8xf32>
    %107 = tpu.matmul %106, %93, %cst_33 {dimension_numbers = #tpu.dot_dimension_numbers<[1], [0], [0], [1], [0, 0, 1, 1], [], []>} : vector<16x16xbf16>, vector<16x8xbf16>, vector<16x8xf32> -> vector<16x8xf32>
    %108 = arith.truncf %107 : vector<16x8xf32> to vector<16x8xbf16>
    %109 = vector.extract_strided_slice %25 {offsets = [24, 0], sizes = [8, 128], strides = [1, 1]} : vector<128x128xbf16> to vector<8x128xbf16>
    %cst_34 = arith.constant dense<0.000000e+00> : vector<16x128xf32>
    %110 = tpu.matmul %108, %109, %cst_34 {dimension_numbers = #tpu.dot_dimension_numbers<[1], [0], [0], [1], [0, 0, 1, 1], [], []>} : vector<16x8xbf16>, vector<8x128xbf16>, vector<16x128xf32> -> vector<16x128xf32>
    %111 = arith.addf %90, %110 : vector<16x128xf32>
    %112 = vector.extract_strided_slice %17 {offsets = [16, 0], sizes = [16, 128], strides = [1, 1]} : vector<32x128xbf16> to vector<16x128xbf16>
    %cst_35 = arith.constant 0.000000e+00 : f32
    %113 = vector.broadcast %cst_35 : f32 to vector<16x128xf32>
    %114 = vector.extract_strided_slice %112 {offsets = [0, 0], sizes = [16, 8], strides = [1, 1]} : vector<16x128xbf16> to vector<16x8xbf16>
    %115 = vector.extract_strided_slice %112 {offsets = [0, 32], sizes = [16, 8], strides = [1, 1]} : vector<16x128xbf16> to vector<16x8xbf16>
    %116 = vector.extract_strided_slice %112 {offsets = [0, 64], sizes = [16, 8], strides = [1, 1]} : vector<16x128xbf16> to vector<16x8xbf16>
    %cst_36 = arith.constant dense<0.000000e+00> : vector<16x16xf32>
    %117 = tpu.matmul %114, %115, %cst_36 {dimension_numbers = #tpu.dot_dimension_numbers<[1], [1], [0], [0], [0, 0, 1, 0], [], []>} : vector<16x8xbf16>, vector<16x8xbf16>, vector<16x16xf32> -> vector<16x16xf32>
    %118 = arith.addf %117, %23 : vector<16x16xf32>
    %cst_37 = arith.constant dense<0xFF800000> : vector<16xf32>
    %119 = vector.multi_reduction <maximumf>, %118, %cst_37 [1] : vector<16x16xf32> to vector<16xf32>
    %120 = vector.shape_cast %119 : vector<16xf32> to vector<16x1xf32>
    %121 = vector.broadcast %120 : vector<16x1xf32> to vector<16x16xf32>
    %122 = arith.subf %118, %121 : vector<16x16xf32>
    %123 = math.exp %122 : vector<16x16xf32>
    %cst_38 = arith.constant dense<0.000000e+00> : vector<16xf32>
    %124 = vector.multi_reduction <add>, %123, %cst_38 [1] : vector<16x16xf32> to vector<16xf32>
    %125 = vector.shape_cast %124 : vector<16xf32> to vector<16x1xf32>
    %126 = tpu.reciprocal %125 {approx = true} : vector<16x1xf32> -> vector<16x1xf32>
    %127 = vector.broadcast %126 : vector<16x1xf32> to vector<16x16xf32>
    %128 = arith.mulf %123, %127 : vector<16x16xf32>
    %129 = arith.truncf %128 : vector<16x16xf32> to vector<16x16xbf16>
    %cst_39 = arith.constant dense<0.000000e+00> : vector<16x8xf32>
    %130 = tpu.matmul %129, %116, %cst_39 {dimension_numbers = #tpu.dot_dimension_numbers<[1], [0], [0], [1], [0, 0, 1, 1], [], []>} : vector<16x16xbf16>, vector<16x8xbf16>, vector<16x8xf32> -> vector<16x8xf32>
    %131 = arith.truncf %130 : vector<16x8xf32> to vector<16x8xbf16>
    %132 = vector.extract_strided_slice %25 {offsets = [0, 0], sizes = [8, 128], strides = [1, 1]} : vector<128x128xbf16> to vector<8x128xbf16>
    %cst_40 = arith.constant dense<0.000000e+00> : vector<16x128xf32>
    %133 = tpu.matmul %131, %132, %cst_40 {dimension_numbers = #tpu.dot_dimension_numbers<[1], [0], [0], [1], [0, 0, 1, 1], [], []>} : vector<16x8xbf16>, vector<8x128xbf16>, vector<16x128xf32> -> vector<16x128xf32>
    %134 = arith.addf %113, %133 : vector<16x128xf32>
    %135 = vector.extract_strided_slice %112 {offsets = [0, 8], sizes = [16, 8], strides = [1, 1]} : vector<16x128xbf16> to vector<16x8xbf16>
    %136 = vector.extract_strided_slice %112 {offsets = [0, 40], sizes = [16, 8], strides = [1, 1]} : vector<16x128xbf16> to vector<16x8xbf16>
    %137 = vector.extract_strided_slice %112 {offsets = [0, 72], sizes = [16, 8], strides = [1, 1]} : vector<16x128xbf16> to vector<16x8xbf16>
    %cst_41 = arith.constant dense<0.000000e+00> : vector<16x16xf32>
    %138 = tpu.matmul %135, %136, %cst_41 {dimension_numbers = #tpu.dot_dimension_numbers<[1], [1], [0], [0], [0, 0, 1, 0], [], []>} : vector<16x8xbf16>, vector<16x8xbf16>, vector<16x16xf32> -> vector<16x16xf32>
    %139 = arith.addf %138, %23 : vector<16x16xf32>
    %cst_42 = arith.constant dense<0xFF800000> : vector<16xf32>
    %140 = vector.multi_reduction <maximumf>, %139, %cst_42 [1] : vector<16x16xf32> to vector<16xf32>
    %141 = vector.shape_cast %140 : vector<16xf32> to vector<16x1xf32>
    %142 = vector.broadcast %141 : vector<16x1xf32> to vector<16x16xf32>
    %143 = arith.subf %139, %142 : vector<16x16xf32>
    %144 = math.exp %143 : vector<16x16xf32>
    %cst_43 = arith.constant dense<0.000000e+00> : vector<16xf32>
    %145 = vector.multi_reduction <add>, %144, %cst_43 [1] : vector<16x16xf32> to vector<16xf32>
    %146 = vector.shape_cast %145 : vector<16xf32> to vector<16x1xf32>
    %147 = tpu.reciprocal %146 {approx = true} : vector<16x1xf32> -> vector<16x1xf32>
    %148 = vector.broadcast %147 : vector<16x1xf32> to vector<16x16xf32>
    %149 = arith.mulf %144, %148 : vector<16x16xf32>
    %150 = arith.truncf %149 : vector<16x16xf32> to vector<16x16xbf16>
    %cst_44 = arith.constant dense<0.000000e+00> : vector<16x8xf32>
    %151 = tpu.matmul %150, %137, %cst_44 {dimension_numbers = #tpu.dot_dimension_numbers<[1], [0], [0], [1], [0, 0, 1, 1], [], []>} : vector<16x16xbf16>, vector<16x8xbf16>, vector<16x8xf32> -> vector<16x8xf32>
    %152 = arith.truncf %151 : vector<16x8xf32> to vector<16x8xbf16>
    %153 = vector.extract_strided_slice %25 {offsets = [8, 0], sizes = [8, 128], strides = [1, 1]} : vector<128x128xbf16> to vector<8x128xbf16>
    %cst_45 = arith.constant dense<0.000000e+00> : vector<16x128xf32>
    %154 = tpu.matmul %152, %153, %cst_45 {dimension_numbers = #tpu.dot_dimension_numbers<[1], [0], [0], [1], [0, 0, 1, 1], [], []>} : vector<16x8xbf16>, vector<8x128xbf16>, vector<16x128xf32> -> vector<16x128xf32>
    %155 = arith.addf %134, %154 : vector<16x128xf32>
    %156 = vector.extract_strided_slice %112 {offsets = [0, 16], sizes = [16, 8], strides = [1, 1]} : vector<16x128xbf16> to vector<16x8xbf16>
    %157 = vector.extract_strided_slice %112 {offsets = [0, 48], sizes = [16, 8], strides = [1, 1]} : vector<16x128xbf16> to vector<16x8xbf16>
    %158 = vector.extract_strided_slice %112 {offsets = [0, 80], sizes = [16, 8], strides = [1, 1]} : vector<16x128xbf16> to vector<16x8xbf16>
    %cst_46 = arith.constant dense<0.000000e+00> : vector<16x16xf32>
    %159 = tpu.matmul %156, %157, %cst_46 {dimension_numbers = #tpu.dot_dimension_numbers<[1], [1], [0], [0], [0, 0, 1, 0], [], []>} : vector<16x8xbf16>, vector<16x8xbf16>, vector<16x16xf32> -> vector<16x16xf32>
    %160 = arith.addf %159, %23 : vector<16x16xf32>
    %cst_47 = arith.constant dense<0xFF800000> : vector<16xf32>
    %161 = vector.multi_reduction <maximumf>, %160, %cst_47 [1] : vector<16x16xf32> to vector<16xf32>
    %162 = vector.shape_cast %161 : vector<16xf32> to vector<16x1xf32>
    %163 = vector.broadcast %162 : vector<16x1xf32> to vector<16x16xf32>
    %164 = arith.subf %160, %163 : vector<16x16xf32>
    %165 = math.exp %164 : vector<16x16xf32>
    %cst_48 = arith.constant dense<0.000000e+00> : vector<16xf32>
    %166 = vector.multi_reduction <add>, %165, %cst_48 [1] : vector<16x16xf32> to vector<16xf32>
    %167 = vector.shape_cast %166 : vector<16xf32> to vector<16x1xf32>
    %168 = tpu.reciprocal %167 {approx = true} : vector<16x1xf32> -> vector<16x1xf32>
    %169 = vector.broadcast %168 : vector<16x1xf32> to vector<16x16xf32>
    %170 = arith.mulf %165, %169 : vector<16x16xf32>
    %171 = arith.truncf %170 : vector<16x16xf32> to vector<16x16xbf16>
    %cst_49 = arith.constant dense<0.000000e+00> : vector<16x8xf32>
    %172 = tpu.matmul %171, %158, %cst_49 {dimension_numbers = #tpu.dot_dimension_numbers<[1], [0], [0], [1], [0, 0, 1, 1], [], []>} : vector<16x16xbf16>, vector<16x8xbf16>, vector<16x8xf32> -> vector<16x8xf32>
    %173 = arith.truncf %172 : vector<16x8xf32> to vector<16x8xbf16>
    %174 = vector.extract_strided_slice %25 {offsets = [16, 0], sizes = [8, 128], strides = [1, 1]} : vector<128x128xbf16> to vector<8x128xbf16>
    %cst_50 = arith.constant dense<0.000000e+00> : vector<16x128xf32>
    %175 = tpu.matmul %173, %174, %cst_50 {dimension_numbers = #tpu.dot_dimension_numbers<[1], [0], [0], [1], [0, 0, 1, 1], [], []>} : vector<16x8xbf16>, vector<8x128xbf16>, vector<16x128xf32> -> vector<16x128xf32>
    %176 = arith.addf %155, %175 : vector<16x128xf32>
    %177 = vector.extract_strided_slice %112 {offsets = [0, 24], sizes = [16, 8], strides = [1, 1]} : vector<16x128xbf16> to vector<16x8xbf16>
    %178 = vector.extract_strided_slice %112 {offsets = [0, 56], sizes = [16, 8], strides = [1, 1]} : vector<16x128xbf16> to vector<16x8xbf16>
    %179 = vector.extract_strided_slice %112 {offsets = [0, 88], sizes = [16, 8], strides = [1, 1]} : vector<16x128xbf16> to vector<16x8xbf16>
    %cst_51 = arith.constant dense<0.000000e+00> : vector<16x16xf32>
    %180 = tpu.matmul %177, %178, %cst_51 {dimension_numbers = #tpu.dot_dimension_numbers<[1], [1], [0], [0], [0, 0, 1, 0], [], []>} : vector<16x8xbf16>, vector<16x8xbf16>, vector<16x16xf32> -> vector<16x16xf32>
    %181 = arith.addf %180, %23 : vector<16x16xf32>
    %cst_52 = arith.constant dense<0xFF800000> : vector<16xf32>
    %182 = vector.multi_reduction <maximumf>, %181, %cst_52 [1] : vector<16x16xf32> to vector<16xf32>
    %183 = vector.shape_cast %182 : vector<16xf32> to vector<16x1xf32>
    %184 = vector.broadcast %183 : vector<16x1xf32> to vector<16x16xf32>
    %185 = arith.subf %181, %184 : vector<16x16xf32>
    %186 = math.exp %185 : vector<16x16xf32>
    %cst_53 = arith.constant dense<0.000000e+00> : vector<16xf32>
    %187 = vector.multi_reduction <add>, %186, %cst_53 [1] : vector<16x16xf32> to vector<16xf32>
    %188 = vector.shape_cast %187 : vector<16xf32> to vector<16x1xf32>
    %189 = tpu.reciprocal %188 {approx = true} : vector<16x1xf32> -> vector<16x1xf32>
    %190 = vector.broadcast %189 : vector<16x1xf32> to vector<16x16xf32>
    %191 = arith.mulf %186, %190 : vector<16x16xf32>
    %192 = arith.truncf %191 : vector<16x16xf32> to vector<16x16xbf16>
    %cst_54 = arith.constant dense<0.000000e+00> : vector<16x8xf32>
    %193 = tpu.matmul %192, %179, %cst_54 {dimension_numbers = #tpu.dot_dimension_numbers<[1], [0], [0], [1], [0, 0, 1, 1], [], []>} : vector<16x16xbf16>, vector<16x8xbf16>, vector<16x8xf32> -> vector<16x8xf32>
    %194 = arith.truncf %193 : vector<16x8xf32> to vector<16x8xbf16>
    %195 = vector.extract_strided_slice %25 {offsets = [24, 0], sizes = [8, 128], strides = [1, 1]} : vector<128x128xbf16> to vector<8x128xbf16>
    %cst_55 = arith.constant dense<0.000000e+00> : vector<16x128xf32>
    %196 = tpu.matmul %194, %195, %cst_55 {dimension_numbers = #tpu.dot_dimension_numbers<[1], [0], [0], [1], [0, 0, 1, 1], [], []>} : vector<16x8xbf16>, vector<8x128xbf16>, vector<16x128xf32> -> vector<16x128xf32>
    %197 = arith.addf %176, %196 : vector<16x128xf32>
    %198 = tpu.concatenate %111, %197 in 0 : vector<16x128xf32>, vector<16x128xf32> -> vector<32x128xf32>
    %199 = vector.extract_strided_slice %6 {offsets = [1, 0], sizes = [1, 128], strides = [1, 1]} : vector<8x128xf32> to vector<1x128xf32>
    %200 = vector.broadcast %199 : vector<1x128xf32> to vector<32x128xf32>
    %201 = arith.addf %198, %200 : vector<32x128xf32>
    %202 = arith.addf %201, %4 : vector<32x128xf32>
    %203 = vector.extract_strided_slice %6 {offsets = [2, 0], sizes = [1, 128], strides = [1, 1]} : vector<8x128xf32> to vector<1x128xf32>
    %204 = vector.extract_strided_slice %6 {offsets = [3, 0], sizes = [1, 128], strides = [1, 1]} : vector<8x128xf32> to vector<1x128xf32>
    %cst_56 = arith.constant dense<0.000000e+00> : vector<32xf32>
    %205 = vector.multi_reduction <add>, %202, %cst_56 [1] : vector<32x128xf32> to vector<32xf32>
    %206 = vector.shape_cast %205 : vector<32xf32> to vector<32x1xf32>
    %cst_57 = arith.constant 3.125000e-02 : f32
    %207 = vector.broadcast %cst_57 : f32 to vector<32x1xf32>
    %208 = arith.mulf %206, %207 : vector<32x1xf32>
    %209 = vector.broadcast %208 : vector<32x1xf32> to vector<32x128xf32>
    %210 = arith.subf %202, %209 : vector<32x128xf32>
    %cst_58 = arith.constant 0.000000e+00 : f32
    %211 = vector.broadcast %cst_58 : f32 to vector<32x128xf32>
    %212 = arith.select %9, %210, %211 : vector<32x128xi1>, vector<32x128xf32>
    %213 = arith.mulf %212, %212 : vector<32x128xf32>
    %cst_59 = arith.constant dense<0.000000e+00> : vector<32xf32>
    %214 = vector.multi_reduction <add>, %213, %cst_59 [1] : vector<32x128xf32> to vector<32xf32>
    %215 = vector.shape_cast %214 : vector<32xf32> to vector<32x1xf32>
    %cst_60 = arith.constant 3.125000e-02 : f32
    %216 = vector.broadcast %cst_60 : f32 to vector<32x1xf32>
    %217 = arith.mulf %215, %216 : vector<32x1xf32>
    %cst_61 = arith.constant 9.99999996E-13 : f32
    %218 = vector.broadcast %cst_61 : f32 to vector<32x1xf32>
    %219 = arith.addf %217, %218 : vector<32x1xf32>
    %220 = math.rsqrt %219 : vector<32x1xf32>
    %221 = vector.broadcast %220 : vector<32x1xf32> to vector<32x128xf32>
    %222 = arith.mulf %212, %221 : vector<32x128xf32>
    %223 = vector.broadcast %203 : vector<1x128xf32> to vector<32x128xf32>
    %224 = arith.mulf %222, %223 : vector<32x128xf32>
    %225 = vector.broadcast %204 : vector<1x128xf32> to vector<32x128xf32>
    %226 = arith.addf %224, %225 : vector<32x128xf32>
    %227 = arith.truncf %226 : vector<32x128xf32> to vector<32x128xbf16>
    %c0_62 = arith.constant 0 : index
    %c0_63 = arith.constant 0 : index
    %c0_64 = arith.constant 0 : index
    %228 = vector.load %arg5[%c0_62, %c0_63, %c0_64] : memref<1x128x128xbf16, #tpu.memory_space<vmem>>, vector<1x128x128xbf16>
    %229 = vector.shape_cast %228 : vector<1x128x128xbf16> to vector<128x128xbf16>
    %cst_65 = arith.constant dense<0.000000e+00> : vector<32x128xf32>
    %230 = tpu.matmul %227, %229, %cst_65 {dimension_numbers = #tpu.dot_dimension_numbers<[1], [0], [0], [1], [0, 0, 1, 1], [], []>} : vector<32x128xbf16>, vector<128x128xbf16>, vector<32x128xf32> -> vector<32x128xf32>
    %231 = vector.extract_strided_slice %6 {offsets = [4, 0], sizes = [1, 128], strides = [1, 1]} : vector<8x128xf32> to vector<1x128xf32>
    %232 = vector.broadcast %231 : vector<1x128xf32> to vector<32x128xf32>
    %233 = arith.addf %230, %232 : vector<32x128xf32>
    %cst_66 = arith.constant 5.000000e-01 : f32
    %234 = vector.broadcast %cst_66 : f32 to vector<32x128xf32>
    %235 = arith.mulf %234, %233 : vector<32x128xf32>
    %cst_67 = arith.constant 4.471500e-02 : f32
    %236 = vector.broadcast %cst_67 : f32 to vector<32x128xf32>
    %237 = arith.mulf %236, %233 : vector<32x128xf32>
    %238 = arith.mulf %237, %233 : vector<32x128xf32>
    %239 = arith.mulf %238, %233 : vector<32x128xf32>
    %240 = arith.addf %233, %239 : vector<32x128xf32>
    %cst_68 = arith.constant 0.797884583 : f32
    %241 = vector.broadcast %cst_68 : f32 to vector<32x128xf32>
    %242 = arith.mulf %241, %240 : vector<32x128xf32>
    %243 = math.tanh %242 : vector<32x128xf32>
    %cst_69 = arith.constant 1.000000e+00 : f32
    %244 = vector.broadcast %cst_69 : f32 to vector<32x128xf32>
    %245 = arith.addf %244, %243 : vector<32x128xf32>
    %246 = arith.mulf %235, %245 : vector<32x128xf32>
    %247 = arith.truncf %246 : vector<32x128xf32> to vector<32x128xbf16>
    %c0_70 = arith.constant 0 : index
    %c0_71 = arith.constant 0 : index
    %c0_72 = arith.constant 0 : index
    %248 = vector.load %arg6[%c0_70, %c0_71, %c0_72] : memref<1x128x128xbf16, #tpu.memory_space<vmem>>, vector<1x128x128xbf16>
    %249 = vector.shape_cast %248 : vector<1x128x128xbf16> to vector<128x128xbf16>
    %cst_73 = arith.constant dense<0.000000e+00> : vector<32x128xf32>
    %250 = tpu.matmul %247, %249, %cst_73 {dimension_numbers = #tpu.dot_dimension_numbers<[1], [0], [0], [1], [0, 0, 1, 1], [], []>} : vector<32x128xbf16>, vector<128x128xbf16>, vector<32x128xf32> -> vector<32x128xf32>
    %251 = vector.extract_strided_slice %6 {offsets = [5, 0], sizes = [1, 128], strides = [1, 1]} : vector<8x128xf32> to vector<1x128xf32>
    %252 = vector.broadcast %251 : vector<1x128xf32> to vector<32x128xf32>
    %253 = arith.addf %250, %252 : vector<32x128xf32>
    %254 = arith.addf %253, %226 : vector<32x128xf32>
    %255 = vector.extract_strided_slice %6 {offsets = [6, 0], sizes = [1, 128], strides = [1, 1]} : vector<8x128xf32> to vector<1x128xf32>
    %256 = vector.extract_strided_slice %6 {offsets = [7, 0], sizes = [1, 128], strides = [1, 1]} : vector<8x128xf32> to vector<1x128xf32>
    %cst_74 = arith.constant dense<0.000000e+00> : vector<32xf32>
    %257 = vector.multi_reduction <add>, %254, %cst_74 [1] : vector<32x128xf32> to vector<32xf32>
    %258 = vector.shape_cast %257 : vector<32xf32> to vector<32x1xf32>
    %cst_75 = arith.constant 3.125000e-02 : f32
    %259 = vector.broadcast %cst_75 : f32 to vector<32x1xf32>
    %260 = arith.mulf %258, %259 : vector<32x1xf32>
    %261 = vector.broadcast %260 : vector<32x1xf32> to vector<32x128xf32>
    %262 = arith.subf %254, %261 : vector<32x128xf32>
    %cst_76 = arith.constant 0.000000e+00 : f32
    %263 = vector.broadcast %cst_76 : f32 to vector<32x128xf32>
    %264 = arith.select %9, %262, %263 : vector<32x128xi1>, vector<32x128xf32>
    %265 = arith.mulf %264, %264 : vector<32x128xf32>
    %cst_77 = arith.constant dense<0.000000e+00> : vector<32xf32>
    %266 = vector.multi_reduction <add>, %265, %cst_77 [1] : vector<32x128xf32> to vector<32xf32>
    %267 = vector.shape_cast %266 : vector<32xf32> to vector<32x1xf32>
    %cst_78 = arith.constant 3.125000e-02 : f32
    %268 = vector.broadcast %cst_78 : f32 to vector<32x1xf32>
    %269 = arith.mulf %267, %268 : vector<32x1xf32>
    %cst_79 = arith.constant 9.99999996E-13 : f32
    %270 = vector.broadcast %cst_79 : f32 to vector<32x1xf32>
    %271 = arith.addf %269, %270 : vector<32x1xf32>
    %272 = math.rsqrt %271 : vector<32x1xf32>
    %273 = vector.broadcast %272 : vector<32x1xf32> to vector<32x128xf32>
    %274 = arith.mulf %264, %273 : vector<32x128xf32>
    %275 = vector.broadcast %255 : vector<1x128xf32> to vector<32x128xf32>
    %276 = arith.mulf %274, %275 : vector<32x128xf32>
    %277 = vector.broadcast %256 : vector<1x128xf32> to vector<32x128xf32>
    %278 = arith.addf %276, %277 : vector<32x128xf32>
    %279 = vector.shape_cast %278 : vector<32x128xf32> to vector<2x16x128xf32>
    %c0_80 = arith.constant 0 : index
    %c0_81 = arith.constant 0 : index
    %c0_82 = arith.constant 0 : index
    %280 = vector.load %arg8[%c0_80, %c0_81, %c0_82] : memref<2x16x128xf32, #tpu.memory_space<vmem>>, vector<2x16x128xf32>
    tpu.vector_store %arg8[%c0_80, %c0_81, %c0_82], %279 {strides = array<i32>} : memref<2x16x128xf32, #tpu.memory_space<vmem>>, vector<2x16x128xf32>,
    return
  }
  func.func @transform_0(%arg0: i32, %arg1: i32) -> (i32, i32, i32) {
    %c0_i32 = arith.constant 0 : i32
    %c0_i32_0 = arith.constant 0 : i32
    %c0_i32_1 = arith.constant 0 : i32
    return %arg0, %c0_i32, %c0_i32_0 : i32, i32, i32
  }
  func.func @transform_1(%arg0: i32, %arg1: i32) -> (i32, i32, i32) {
    %c0_i32 = arith.constant 0 : i32
    %c0_i32_0 = arith.constant 0 : i32
    %c0_i32_1 = arith.constant 0 : i32
    return %arg1, %c0_i32, %c0_i32_0 : i32, i32, i32
  }
  func.func @transform_2(%arg0: i32, %arg1: i32) -> (i32, i32, i32) {
    %c0_i32 = arith.constant 0 : i32
    %c0_i32_0 = arith.constant 0 : i32
    %c0_i32_1 = arith.constant 0 : i32
    return %arg1, %c0_i32, %c0_i32_0 : i32, i32, i32
  }
  func.func @transform_3(%arg0: i32, %arg1: i32) -> (i32, i32, i32) {
    %c0_i32 = arith.constant 0 : i32
    %c0_i32_0 = arith.constant 0 : i32
    %c0_i32_1 = arith.constant 0 : i32
    return %arg1, %c0_i32, %c0_i32_0 : i32, i32, i32
  }
  func.func @transform_4(%arg0: i32, %arg1: i32) -> (i32, i32, i32) {
    %c0_i32 = arith.constant 0 : i32
    %c0_i32_0 = arith.constant 0 : i32
    %c0_i32_1 = arith.constant 0 : i32
    return %arg1, %c0_i32, %c0_i32_0 : i32, i32, i32
  }
  func.func @transform_5(%arg0: i32, %arg1: i32) -> (i32, i32, i32) {
    %c0_i32 = arith.constant 0 : i32
    %c0_i32_0 = arith.constant 0 : i32
    %c0_i32_1 = arith.constant 0 : i32
    return %arg1, %c0_i32, %c0_i32_0 : i32, i32, i32
  }
  func.func @transform_6(%arg0: i32, %arg1: i32) -> (i32, i32, i32) {
    %c0_i32 = arith.constant 0 : i32
    %c0_i32_0 = arith.constant 0 : i32
    %c0_i32_1 = arith.constant 0 : i32
    return %arg0, %c0_i32, %c0_i32_0 : i32, i32, i32
  }
}

</mosaic_0001>

<llo_original>
// kernel: tpu_custom_call.1
$region0: #{tpu_custom_call.1}
  #allocation0 [shape = 'u32[]', space=smem, size = 0x4, offset = 0x4, fixed_abs, tag = 'smem constant byte address 0x4 - core index']
  #allocation1 [shape = 'u32[144,128]{1,0:T(1,128)}', space=vmem, size = 0x12000, scoped, tag = 'internal scratch']
  %s0 = inlined_call_operand.hbm [shape: f32[2,16,128], index: 0, kind: input, shape index: {}]
  %s1 = inlined_call_operand.hbm [shape: bf16[3,128,128], index: 1, kind: input, shape index: {}]
  %s2 = inlined_call_operand.hbm [shape: bf16[3,128,128], index: 2, kind: input, shape index: {}]
  %s3 = inlined_call_operand.hbm [shape: bf16[3,128,128], index: 3, kind: input, shape index: {}]
  %s4 = inlined_call_operand.hbm [shape: bf16[3,128,128], index: 4, kind: input, shape index: {}]
  %s5 = inlined_call_operand.hbm [shape: f32[3,8,128], index: 5, kind: input, shape index: {}]
  %s6 = inlined_call_operand.hbm [shape: f32[2,16,128], index: 6, kind: output, shape index: {}]
  %s7 = sld [smem:[#allocation0]]
  $region85: #{tpu_custom_call.1} parent=0
    _
  %s9 = ssub.s32 1, %s7
  %s10 = scalar_select 0, %s9, %s7
  $region1: #{tpu_custom_call.1} parent=0
    #allocation2 [shape = 'u8[16384]{0}', space=vmem, size = 0x4000, scoped, tag = 'input window, operand 0, single buffered']
    #allocation3 [shape = 's32[2]{0}', space=sflag, size = 0x8, scoped, tag = 'scoped memory for tpu_custom_call.1']
    #allocation4 [shape = 's32[2]{0}', space=sflag, size = 0x8, scoped, tag = 'scoped memory for tpu_custom_call.1']
    #allocation5 [shape = 'u8[65536]{0}', space=vmem, size = 0x10000, scoped, tag = 'input window, operand 1']
    #allocation6 [shape = 's32[2]{0}', space=sflag, size = 0x8, scoped, tag = 'scoped memory for tpu_custom_call.1']
    #allocation7 [shape = 'u8[65536]{0}', space=vmem, size = 0x10000, scoped, tag = 'input window, operand 2']
    #allocation8 [shape = 'u8[65536]{0}', space=vmem, size = 0x10000, scoped, tag = 'input window, operand 3']
    #allocation9 [shape = 's32[2]{0}', space=sflag, size = 0x8, scoped, tag = 'scoped memory for tpu_custom_call.1']
    #allocation10 [shape = 'u8[65536]{0}', space=vmem, size = 0x10000, scoped, tag = 'input window, operand 4']
    #allocation11 [shape = 'u8[8192]{0}', space=vmem, size = 0x2000, scoped, tag = 'input window, operand 5']
    #allocation12 [shape = 's32[2]{0}', space=sflag, size = 0x8, scoped, tag = 'scoped memory for tpu_custom_call.1']
    #allocation13 [shape = 'u8[16384]{0}', space=vmem, size = 0x4000, scoped, tag = 'output window, operand 0, single buffered']
    %11 = vsyncpa [#allocation3], 0
    %12 = vsyncpa [#allocation6], 0
    %s13 = scalar_lea.sflag [#allocation6], 1
    %14 = vsyncpa %s13, 0
    %15 = vsyncpa [#allocation9], 0
    %s16 = scalar_lea.sflag [#allocation9], 1
    %17 = vsyncpa %s16, 0
    %18 = vsyncpa [#allocation12], 0
    %s19 = scalar_lea.sflag [#allocation12], 1
    %20 = vsyncpa %s19, 0
    %21 = vsyncpa [#allocation4], 0
    loop: start=0, step=1, limit=5
    $region2: #{tpu_custom_call.1} parent=1 // loop_pre_header
      _
    $region3: #{tpu_custom_call.1} parent=1 // loop_header
      %s23 = sphi 0, %s27
      %p24 = scmp.ge.s32.totalorder %s23, 5
      %s30 = sphi 0, %s42
      %s31 = sphi 0, %s38
      %s32 = sphi 0, %s30
      %s33 = sphi 0, %s31
      %s34 = sphi 0, %s32
      %s35 = sphi 0, %s33
      %s45 = sphi 0, %s47
      %s48 = sphi 0, %s45
      %s49 = sphi 0, %s48
      %s65 = sphi 0, %s49
      %s71 = sphi 0, %s73
      %s74 = sphi 0, %s71
      %s75 = sphi 0, %s74
      %s91 = sphi 0, %s75
      %s97 = sphi 0, %s99
      %s100 = sphi 0, %s97
      %s101 = sphi 0, %s100
      %s117 = sphi 0, %s101
      %s123 = sphi 0, %s125
      %s126 = sphi 0, %s123
      %s127 = sphi 0, %s126
      %s143 = sphi 0, %s127
      %s149 = sphi 0, %s151
      %s152 = sphi 0, %s149
      %s153 = sphi 0, %s152
      %s169 = sphi 0, %s153
      %s175 = sphi 0, %s177
      %s178 = sphi 0, %s175
      %s179 = sphi 0, %s178
      %s195 = sphi 0, %s179
      %s201 = sphi 0, %s203
      %s204 = sphi 0, %s201
      %s205 = sphi 0, %s204
      %s221 = sphi 0, %s205
    $region4: #{tpu_custom_call.1} parent=1 // loop_header_branch
      %26 = sbr.rel (%p24) target = $region8
    $region5: #{tpu_custom_call.1} parent=1 // loop_body
      %s28 = ssub.s32 %s23, 1
      %s29 = ssub.s32 %s23, 2
      %s36 = sadd.s32 1, %s31
      %p37 = scmp.ge.s32.totalorder %s36, 3
      %s38 = scalar_select %p37, 0, %s36
      %s39 = sadd.s32 1, %s30
      %s40 = scalar_select %p37, %s39, %s30
      %p41 = scmp.ge.s32.totalorder %s40, 1
      %s42 = scalar_select %p41, 0, %s40
      %s43 = ssub.s32 %s30, %s42
      %p44 = scmp.eq.s32.totalorder %s43, 0
      %s46 = sadd.s32 %s45, 1
      %s47 = scalar_select %p44, %s45, %s46
      %p50 = pneg %p44
      %p51 = scmp.eq.s32.totalorder %s23, 2
      %p52 = por %p50, %p51
      %p53 = scmp.ne.s32.totalorder %s45, %s48
      %p54 = scmp.eq.s32.totalorder %s23, 0
      %p55 = por %p53, %p54
      %p56 = scmp.ne.s32.totalorder %s45, %s48
      %p57 = scmp.eq.s32.totalorder %s28, 2
      %p58 = por %p56, %p57
      %p59 = scmp.ne.s32.totalorder %s48, %s49
      %p60 = scmp.eq.s32.totalorder %s28, 0
      %p61 = por %p59, %p60
      %p62 = scmp.ne.s32.totalorder %s48, %s49
      %p63 = scmp.eq.s32.totalorder %s29, 2
      %p64 = por %p62, %p63
      %p66 = scmp.ne.s32.totalorder %s49, %s65
      %p67 = scmp.eq.s32.totalorder %s29, 0
      %p68 = por %p66, %p67
      %s69 = ssub.s32 %s31, %s38
      %p70 = scmp.eq.s32.totalorder %s69, 0
      %s72 = sadd.s32 %s71, 1
      %s73 = scalar_select %p70, %s71, %s72
      %p76 = pneg %p70
      %p77 = scmp.eq.s32.totalorder %s23, 2
      %p78 = por %p76, %p77
      %p79 = scmp.ne.s32.totalorder %s71, %s74
      %p80 = scmp.eq.s32.totalorder %s23, 0
      %p81 = por %p79, %p80
      %p82 = scmp.ne.s32.totalorder %s71, %s74
      %p83 = scmp.eq.s32.totalorder %s28, 2
      %p84 = por %p82, %p83
      %p85 = scmp.ne.s32.totalorder %s74, %s75
      %p86 = scmp.eq.s32.totalorder %s28, 0
      %p87 = por %p85, %p86
      %p88 = scmp.ne.s32.totalorder %s74, %s75
      %p89 = scmp.eq.s32.totalorder %s29, 2
      %p90 = por %p88, %p89
      %p92 = scmp.ne.s32.totalorder %s75, %s91
      %p93 = scmp.eq.s32.totalorder %s29, 0
      %p94 = por %p92, %p93
      %s95 = ssub.s32 %s31, %s38
      %p96 = scmp.eq.s32.totalorder %s95, 0
      %s98 = sadd.s32 %s97, 1
      %s99 = scalar_select %p96, %s97, %s98
      %p102 = pneg %p96
      %p103 = scmp.eq.s32.totalorder %s23, 2
      %p104 = por %p102, %p103
      %p105 = scmp.ne.s32.totalorder %s97, %s100
      %p106 = scmp.eq.s32.totalorder %s23, 0
      %p107 = por %p105, %p106
      %p108 = scmp.ne.s32.totalorder %s97, %s100
      %p109 = scmp.eq.s32.totalorder %s28, 2
      %p110 = por %p108, %p109
      %p111 = scmp.ne.s32.totalorder %s100, %s101
      %p112 = scmp.eq.s32.totalorder %s28, 0
      %p113 = por %p111, %p112
      %p114 = scmp.ne.s32.totalorder %s100, %s101
      %p115 = scmp.eq.s32.totalorder %s29, 2
      %p116 = por %p114, %p115
      %p118 = scmp.ne.s32.totalorder %s101, %s117
      %p119 = scmp.eq.s32.totalorder %s29, 0
      %p120 = por %p118, %p119
      %s121 = ssub.s32 %s31, %s38
      %p122 = scmp.eq.s32.totalorder %s121, 0
      %s124 = sadd.s32 %s123, 1
      %s125 = scalar_select %p122, %s123, %s124
      %p128 = pneg %p122
      %p129 = scmp.eq.s32.totalorder %s23, 2
      %p130 = por %p128, %p129
      %p131 = scmp.ne.s32.totalorder %s123, %s126
      %p132 = scmp.eq.s32.totalorder %s23, 0
      %p133 = por %p131, %p132
      %p134 = scmp.ne.s32.totalorder %s123, %s126
      %p135 = scmp.eq.s32.totalorder %s28, 2
      %p136 = por %p134, %p135
      %p137 = scmp.ne.s32.totalorder %s126, %s127
      %p138 = scmp.eq.s32.totalorder %s28, 0
      %p139 = por %p137, %p138
      %p140 = scmp.ne.s32.totalorder %s126, %s127
      %p141 = scmp.eq.s32.totalorder %s29, 2
      %p142 = por %p140, %p141
      %p144 = scmp.ne.s32.totalorder %s127, %s143
      %p145 = scmp.eq.s32.totalorder %s29, 0
      %p146 = por %p144, %p145
      %s147 = ssub.s32 %s31, %s38
      %p148 = scmp.eq.s32.totalorder %s147, 0
      %s150 = sadd.s32 %s149, 1
      %s151 = scalar_select %p148, %s149, %s150
      %p154 = pneg %p148
      %p155 = scmp.eq.s32.totalorder %s23, 2
      %p156 = por %p154, %p155
      %p157 = scmp.ne.s32.totalorder %s149, %s152
      %p158 = scmp.eq.s32.totalorder %s23, 0
      %p159 = por %p157, %p158
      %p160 = scmp.ne.s32.totalorder %s149, %s152
      %p161 = scmp.eq.s32.totalorder %s28, 2
      %p162 = por %p160, %p161
      %p163 = scmp.ne.s32.totalorder %s152, %s153
      %p164 = scmp.eq.s32.totalorder %s28, 0
      %p165 = por %p163, %p164
      %p166 = scmp.ne.s32.totalorder %s152, %s153
      %p167 = scmp.eq.s32.totalorder %s29, 2
      %p168 = por %p166, %p167
      %p170 = scmp.ne.s32.totalorder %s153, %s169
      %p171 = scmp.eq.s32.totalorder %s29, 0
      %p172 = por %p170, %p171
      %s173 = ssub.s32 %s31, %s38
      %p174 = scmp.eq.s32.totalorder %s173, 0
      %s176 = sadd.s32 %s175, 1
      %s177 = scalar_select %p174, %s175, %s176
      %p180 = pneg %p174
      %p181 = scmp.eq.s32.totalorder %s23, 2
      %p182 = por %p180, %p181
      %p183 = scmp.ne.s32.totalorder %s175, %s178
      %p184 = scmp.eq.s32.totalorder %s23, 0
      %p185 = por %p183, %p184
      %p186 = scmp.ne.s32.totalorder %s175, %s178
      %p187 = scmp.eq.s32.totalorder %s28, 2
      %p188 = por %p186, %p187
      %p189 = scmp.ne.s32.totalorder %s178, %s179
      %p190 = scmp.eq.s32.totalorder %s28, 0
      %p191 = por %p189, %p190
      %p192 = scmp.ne.s32.totalorder %s178, %s179
      %p193 = scmp.eq.s32.totalorder %s29, 2
      %p194 = por %p192, %p193
      %p196 = scmp.ne.s32.totalorder %s179, %s195
      %p197 = scmp.eq.s32.totalorder %s29, 0
      %p198 = por %p196, %p197
      %s199 = ssub.s32 %s30, %s42
      %p200 = scmp.eq.s32.totalorder %s199, 0
      %s202 = sadd.s32 %s201, 1
      %s203 = scalar_select %p200, %s201, %s202
      %p206 = pneg %p200
      %p207 = scmp.eq.s32.totalorder %s23, 2
      %p208 = por %p206, %p207
      %p209 = scmp.ne.s32.totalorder %s201, %s204
      %p210 = scmp.eq.s32.totalorder %s23, 0
      %p211 = por %p209, %p210
      %p212 = scmp.ne.s32.totalorder %s201, %s204
      %p213 = scmp.eq.s32.totalorder %s28, 2
      %p214 = por %p212, %p213
      %p215 = scmp.ne.s32.totalorder %s204, %s205
      %p216 = scmp.eq.s32.totalorder %s28, 0
      %p217 = por %p215, %p216
      %p218 = scmp.ne.s32.totalorder %s204, %s205
      %p219 = scmp.eq.s32.totalorder %s29, 2
      %p220 = por %p218, %p219
      %p222 = scmp.ne.s32.totalorder %s205, %s221
      %p223 = scmp.eq.s32.totalorder %s29, 0
      %p224 = por %p222, %p223
      %p225 = scmp.le.s32.totalorder 1, %s23
      %p226 = scmp.lt.s32.totalorder %s23, 4
      %p227 = pnand %p225, %p226
      %p228 = pneg %p227
      // Predicated region
      $region9: #{tpu_custom_call.1} parent=5 // pred_check
        _
      $region10: #{tpu_custom_call.1} parent=5 // pred_check_branch
        %230 = sbr.rel (%p227) target = $region12
      $region11: #{tpu_custom_call.1} parent=5 // pred_region
        %s231 = ssub.s32 %s23, 1
        // Predicated region
        $region13: #{tpu_custom_call.1} parent=11 // pred_check
          %p232 = pneg %p61
        $region14: #{tpu_custom_call.1} parent=11 // pred_check_branch
          %234 = sbr.rel (%p232) target = $region16
        $region15: #{tpu_custom_call.1} parent=11 // pred_region
          %s235 = smul.u32 2, %s32
          %s237 = ssub.s32 512, 512
          %238 = vsyncadd [#allocation3], %s237
          %s239 = smul.addr %s235, 2
          %s240 = smul.addr %s239, 128
          %s241 = scalar_lea.hbm %s0, %s240
          %s242 = sshll.u32 [#allocation2], 4
          %s243 = int_to_ptr.vmem [resolvable:$true] %s242
          %248 = dma.hbm_to_vmem [thread:$0]  %s241, 512, %s243, [#allocation3], 128, 128, 8
        $region16: #{tpu_custom_call.1} parent=11 // pred_fallthru
          _
      $region12: #{tpu_custom_call.1} parent=5 // pred_fallthru
        _
      %p249 = scmp.lt.s32.totalorder %s23, 3
      // Predicated region
      $region17: #{tpu_custom_call.1} parent=5 // pred_check
        %p250 = pneg %p249
      $region18: #{tpu_custom_call.1} parent=5 // pred_check_branch
        %252 = sbr.rel (%p250) target = $region20
      $region19: #{tpu_custom_call.1} parent=5 // pred_region
        // Predicated region
        $region21: #{tpu_custom_call.1} parent=19 // pred_check
          %p253 = pneg %p81
        $region22: #{tpu_custom_call.1} parent=19 // pred_check_branch
          %255 = sbr.rel (%p253) target = $region24
        $region23: #{tpu_custom_call.1} parent=19 // pred_region
          %s256 = sand.u32 %s23, 1
          %s257 = scalar_lea.sflag [#allocation6], %s256
          %s258 = sand.u32 %s71, 1
          %s259 = smul.addr %s258, 64
          %s260 = scalar_lea.vmem [#allocation5], %s259
          %s262 = ssub.s32 1024, 1024
          %263 = vsyncadd %s257, %s262
          %s264 = smul.addr %s31, 16
          %s265 = smul.addr %s264, 64
          %s266 = scalar_lea.hbm %s1, %s265
          %s267 = sshll.u32 %s260, 4
          %s268 = int_to_ptr.vmem [resolvable:$true] %s267
          %273 = dma.hbm_to_vmem [thread:$0]  %s266, 1024, %s268, %s257, 64, 64, 4
        $region24: #{tpu_custom_call.1} parent=19 // pred_fallthru
          _
        // Predicated region
        $region25: #{tpu_custom_call.1} parent=19 // pred_check
          %p274 = pneg %p107
        $region26: #{tpu_custom_call.1} parent=19 // pred_check_branch
          %276 = sbr.rel (%p274) target = $region28
        $region27: #{tpu_custom_call.1} parent=19 // pred_region
          %s277 = sand.u32 %s23, 1
          %s278 = scalar_lea.sflag [#allocation6], %s277
          %s279 = sand.u32 %s97, 1
          %s280 = smul.addr %s279, 64
          %s281 = scalar_lea.vmem [#allocation7], %s280
          %s283 = ssub.s32 1024, 1024
          %284 = vsyncadd %s278, %s283
          %s285 = smul.addr %s31, 16
          %s286 = smul.addr %s285, 64
          %s287 = scalar_lea.hbm %s2, %s286
          %s288 = sshll.u32 %s281, 4
          %s289 = int_to_ptr.vmem [resolvable:$true] %s288
          %294 = dma.hbm_to_vmem [thread:$0]  %s287, 1024, %s289, %s278, 64, 64, 4
        $region28: #{tpu_custom_call.1} parent=19 // pred_fallthru
          _
        // Predicated region
        $region29: #{tpu_custom_call.1} parent=19 // pred_check
          %p295 = pneg %p133
        $region30: #{tpu_custom_call.1} parent=19 // pred_check_branch
          %297 = sbr.rel (%p295) target = $region32
        $region31: #{tpu_custom_call.1} parent=19 // pred_region
          %s298 = sand.u32 %s23, 1
          %s299 = scalar_lea.sflag [#allocation9], %s298
          %s300 = sand.u32 %s123, 1
          %s301 = smul.addr %s300, 64
          %s302 = scalar_lea.vmem [#allocation8], %s301
          %s304 = ssub.s32 1024, 1024
          %305 = vsyncadd %s299, %s304
          %s306 = smul.addr %s31, 16
          %s307 = smul.addr %s306, 64
          %s308 = scalar_lea.hbm %s3, %s307
          %s309 = sshll.u32 %s302, 4
          %s310 = int_to_ptr.vmem [resolvable:$true] %s309
          %315 = dma.hbm_to_vmem [thread:$0]  %s308, 1024, %s310, %s299, 64, 64, 4
        $region32: #{tpu_custom_call.1} parent=19 // pred_fallthru
          _
        // Predicated region
        $region33: #{tpu_custom_call.1} parent=19 // pred_check
          %p316 = pneg %p159
        $region34: #{tpu_custom_call.1} parent=19 // pred_check_branch
          %318 = sbr.rel (%p316) target = $region36
        $region35: #{tpu_custom_call.1} parent=19 // pred_region
          %s319 = sand.u32 %s23, 1
          %s320 = scalar_lea.sflag [#allocation9], %s319
          %s321 = sand.u32 %s149, 1
          %s322 = smul.addr %s321, 64
          %s323 = scalar_lea.vmem [#allocation10], %s322
          %s325 = ssub.s32 1024, 1024
          %326 = vsyncadd %s320, %s325
          %s327 = smul.addr %s31, 16
          %s328 = smul.addr %s327, 64
          %s329 = scalar_lea.hbm %s4, %s328
          %s330 = sshll.u32 %s323, 4
          %s331 = int_to_ptr.vmem [resolvable:$true] %s330
          %336 = dma.hbm_to_vmem [thread:$0]  %s329, 1024, %s331, %s320, 64, 64, 4
        $region36: #{tpu_custom_call.1} parent=19 // pred_fallthru
          _
        // Predicated region
        $region37: #{tpu_custom_call.1} parent=19 // pred_check
          %p337 = pneg %p185
        $region38: #{tpu_custom_call.1} parent=19 // pred_check_branch
          %339 = sbr.rel (%p337) target = $region40
        $region39: #{tpu_custom_call.1} parent=19 // pred_region
          %s340 = sand.u32 %s175, 1
          %s341 = scalar_lea.sflag [#allocation12], %s340
          %s342 = sand.u32 %s175, 1
          %s343 = smul.addr %s342, 8
          %s344 = scalar_lea.vmem [#allocation11], %s343
          %s346 = ssub.s32 128, 128
          %347 = vsyncadd %s341, %s346
          %s348 = smul.addr %s31, 128
          %s349 = scalar_lea.hbm %s5, %s348
          %s351 = sshll.u32 %s344, 4
          %s352 = int_to_ptr.vmem [resolvable:$true] %s351
          %354 = dma.hbm_to_vmem [thread:$0]  %s349, 128, %s352, %s341
        $region40: #{tpu_custom_call.1} parent=19 // pred_fallthru
          _
      $region20: #{tpu_custom_call.1} parent=5 // pred_fallthru
        _
      %p355 = scmp.le.s32.totalorder 1, %s23
      %p356 = scmp.lt.s32.totalorder %s23, 4
      %p357 = pnand %p355, %p356
      %p358 = pneg %p357
      // Predicated region
      $region41: #{tpu_custom_call.1} parent=5 // pred_check
        _
      $region42: #{tpu_custom_call.1} parent=5 // pred_check_branch
        %360 = sbr.rel (%p357) target = $region44
      $region43: #{tpu_custom_call.1} parent=5 // pred_region
        %s361 = ssub.s32 %s23, 1
        // Predicated region
        $region45: #{tpu_custom_call.1} parent=43 // pred_check
          %p362 = pneg %p61
        $region46: #{tpu_custom_call.1} parent=43 // pred_check_branch
          %364 = sbr.rel (%p362) target = $region48
        $region47: #{tpu_custom_call.1} parent=43 // pred_region
          %365 = dma.done [#allocation3], 512
        $region48: #{tpu_custom_call.1} parent=43 // pred_fallthru
          _
        %s366 = sand.u32 %s28, 1
        %s367 = scalar_lea.sflag [#allocation6], %s366
        %s368 = sand.u32 %s74, 1
        %s369 = smul.addr %s368, 64
        %s370 = scalar_lea.vmem [#allocation5], %s369
        // Predicated region
        $region49: #{tpu_custom_call.1} parent=43 // pred_check
          %p371 = pneg %p87
        $region50: #{tpu_custom_call.1} parent=43 // pred_check_branch
          %373 = sbr.rel (%p371) target = $region52
        $region51: #{tpu_custom_call.1} parent=43 // pred_region
          %374 = dma.done %s367, 1024
        $region52: #{tpu_custom_call.1} parent=43 // pred_fallthru
          _
        %s375 = sand.u32 %s28, 1
        %s376 = scalar_lea.sflag [#allocation6], %s375
        %s377 = sand.u32 %s100, 1
        %s378 = smul.addr %s377, 64
        %s379 = scalar_lea.vmem [#allocation7], %s378
        // Predicated region
        $region53: #{tpu_custom_call.1} parent=43 // pred_check
          %p380 = pneg %p113
        $region54: #{tpu_custom_call.1} parent=43 // pred_check_branch
          %382 = sbr.rel (%p380) target = $region56
        $region55: #{tpu_custom_call.1} parent=43 // pred_region
          %383 = dma.done %s376, 1024
        $region56: #{tpu_custom_call.1} parent=43 // pred_fallthru
          _
        %s384 = sand.u32 %s28, 1
        %s385 = scalar_lea.sflag [#allocation9], %s384
        %s386 = sand.u32 %s126, 1
        %s387 = smul.addr %s386, 64
        %s388 = scalar_lea.vmem [#allocation8], %s387
        // Predicated region
        $region57: #{tpu_custom_call.1} parent=43 // pred_check
          %p389 = pneg %p139
        $region58: #{tpu_custom_call.1} parent=43 // pred_check_branch
          %391 = sbr.rel (%p389) target = $region60
        $region59: #{tpu_custom_call.1} parent=43 // pred_region
          %392 = dma.done %s385, 1024
        $region60: #{tpu_custom_call.1} parent=43 // pred_fallthru
          _
        %s393 = sand.u32 %s28, 1
        %s394 = scalar_lea.sflag [#allocation9], %s393
        %s395 = sand.u32 %s152, 1
        %s396 = smul.addr %s395, 64
        %s397 = scalar_lea.vmem [#allocation10], %s396
        // Predicated region
        $region61: #{tpu_custom_call.1} parent=43 // pred_check
          %p398 = pneg %p165
        $region62: #{tpu_custom_call.1} parent=43 // pred_check_branch
          %400 = sbr.rel (%p398) target = $region64
        $region63: #{tpu_custom_call.1} parent=43 // pred_region
          %401 = dma.done %s394, 1024
        $region64: #{tpu_custom_call.1} parent=43 // pred_fallthru
          _
        %s402 = sand.u32 %s178, 1
        %s403 = scalar_lea.sflag [#allocation12], %s402
        %s404 = sand.u32 %s178, 1
        %s405 = smul.addr %s404, 8
        %s406 = scalar_lea.vmem [#allocation11], %s405
        // Predicated region
        $region65: #{tpu_custom_call.1} parent=43 // pred_check
          %p407 = pneg %p191
        $region66: #{tpu_custom_call.1} parent=43 // pred_check_branch
          %409 = sbr.rel (%p407) target = $region68
        $region67: #{tpu_custom_call.1} parent=43 // pred_region
          %410 = dma.done %s403, 128
        $region68: #{tpu_custom_call.1} parent=43 // pred_fallthru
          _
        %p411 = pneg %p61
        %p412 = pneg %p58
        %s413 = sand.u32 %s28, 1
        %s414 = scalar_lea.sflag [#allocation6], %s413
        %s415 = sand.u32 %s74, 1
        %s416 = smul.addr %s415, 64
        %s417 = scalar_lea.vmem [#allocation5], %s416
        %p418 = pneg %p87
        %p419 = pneg %p84
        %s420 = sand.u32 %s28, 1
        %s421 = scalar_lea.sflag [#allocation6], %s420
        %s422 = sand.u32 %s100, 1
        %s423 = smul.addr %s422, 64
        %s424 = scalar_lea.vmem [#allocation7], %s423
        %p425 = pneg %p113
        %p426 = pneg %p110
        %s427 = sand.u32 %s28, 1
        %s428 = scalar_lea.sflag [#allocation9], %s427
        %s429 = sand.u32 %s126, 1
        %s430 = smul.addr %s429, 64
        %s431 = scalar_lea.vmem [#allocation8], %s430
        %p432 = pneg %p139
        %p433 = pneg %p136
        %s434 = sand.u32 %s28, 1
        %s435 = scalar_lea.sflag [#allocation9], %s434
        %s436 = sand.u32 %s152, 1
        %s437 = smul.addr %s436, 64
        %s438 = scalar_lea.vmem [#allocation10], %s437
        %p439 = pneg %p165
        %p440 = pneg %p162
        %s441 = sand.u32 %s178, 1
        %s442 = scalar_lea.sflag [#allocation12], %s441
        %s443 = sand.u32 %s178, 1
        %s444 = smul.addr %s443, 8
        %s445 = scalar_lea.vmem [#allocation11], %s444
        %p446 = pneg %p191
        %p447 = pneg %p188
        %p448 = pneg %p217
        %p449 = pneg %p214
        %s450 = smul.u32 2, %s32
        %s451 = smul.u32 2, %s32
        %p453 = scmp.eq.s32.totalorder %s33, 0
        // Predicated region
        $region69: #{tpu_custom_call.1} parent=43 // pred_check
          %p454 = pneg %p453
        $region70: #{tpu_custom_call.1} parent=43 // pred_check_branch
          %456 = sbr.rel (%p454) target = $region72
        $region71: #{tpu_custom_call.1} parent=43 // pred_region
          %v457 = vld [vmem:[#allocation2] sm:$0xff]
          %v458 = vld [vmem:[#allocation2 + $0x8] sm:$0xff]
          %v459 = vld [vmem:[#allocation2 + $0x10] sm:$0xff]
          %v460 = vld [vmem:[#allocation2 + $0x18] sm:$0xff]
          %461 = vst [vmem:[#allocation13] sm:$0xff] %v457
          %462 = vst [vmem:[#allocation13 + $0x8] sm:$0xff] %v458
          %463 = vst [vmem:[#allocation13 + $0x10] sm:$0xff] %v459
          %464 = vst [vmem:[#allocation13 + $0x18] sm:$0xff] %v460
        $region72: #{tpu_custom_call.1} parent=43 // pred_fallthru
          _
        %v465 = vld [vmem:[#allocation13] sm:$0xff]
        %v466 = vld [vmem:[#allocation13 + $0x8] sm:$0xff]
        %v467 = vld [vmem:[#allocation13 + $0x10] sm:$0xff]
        %v468 = vld [vmem:[#allocation13 + $0x18] sm:$0xff]
        %v469 = vld [vmem:[%s406] sm:$0xff]
        %v470 = vlaneseq
        %v471 = vand.u32 %v470, 127
        %vm472 = vcmp.lt.s32.totalorder %v471, 32
        %v473 = vpack.c.bf16 %v466, %v465
        %v474 = vpack.c.bf16 %v468, %v467
        %v475 = vld [vmem:[%s370] sm:$0xf]
        %v476 = vld [vmem:[%s370 + $0x4] sm:$0xf]
        %v477 = vld [vmem:[%s370 + $0x8] sm:$0xf]
        %v478 = vld [vmem:[%s370 + $0xc] sm:$0xf]
        %v479 = vld [vmem:[%s370 + $0x10] sm:$0xf]
        %v480 = vld [vmem:[%s370 + $0x14] sm:$0xf]
        %v481 = vld [vmem:[%s370 + $0x18] sm:$0xf]
        %v482 = vld [vmem:[%s370 + $0x1c] sm:$0xf]
        %v483 = vld [vmem:[%s370 + $0x20] sm:$0xf]
        %v484 = vld [vmem:[%s370 + $0x24] sm:$0xf]
        %v485 = vld [vmem:[%s370 + $0x28] sm:$0xf]
        %v486 = vld [vmem:[%s370 + $0x2c] sm:$0xf]
        %v487 = vld [vmem:[%s370 + $0x30] sm:$0xf]
        %v488 = vld [vmem:[%s370 + $0x34] sm:$0xf]
        %v489 = vld [vmem:[%s370 + $0x38] sm:$0xf]
        %v490 = vld [vmem:[%s370 + $0x3c] sm:$0xf]
        %v491 = vlaneseq
        %v492 = vshrl.u32 %v491, 7
        %v493 = vsub.s32 0, %v492
        %v494 = vrot.slane %v469, %v493
        %v511 = vunpack.c.l.b16 %v475
        %v512 = vunpack.c.l.b16 %v476
        %v513 = vunpack.c.l.b16 %v477
        %v514 = vunpack.c.l.b16 %v478
        %v515 = vunpack.c.l.b16 %v479
        %v516 = vunpack.c.l.b16 %v480
        %v517 = vunpack.c.l.b16 %v481
        %v518 = vunpack.c.l.b16 %v482
        %v519 = vunpack.c.l.b16 %v483
        %v520 = vunpack.c.l.b16 %v484
        %v521 = vunpack.c.l.b16 %v485
        %v522 = vunpack.c.l.b16 %v486
        %v523 = vunpack.c.l.b16 %v487
        %v524 = vunpack.c.l.b16 %v488
        %v525 = vunpack.c.l.b16 %v489
        %v526 = vunpack.c.l.b16 %v490
        %v527 = vpack.c.b16 %v512, %v511
        %v528 = vpack.c.b16 %v514, %v513
        %v529 = vpack.c.b16 %v516, %v515
        %v530 = vpack.c.b16 %v518, %v517
        %v531 = vpack.c.b16 %v520, %v519
        %v532 = vpack.c.b16 %v522, %v521
        %v533 = vpack.c.b16 %v524, %v523
        %v534 = vpack.c.b16 %v526, %v525
        %543 = vmatprep.subr.bf16.mxu0 0
        %544 = vmatpush1.bf16.msra.mxu0 %v527
        %545 = vmatprep.subr.bf16.mxu0 0
        %546 = vmatpush1.bf16.msra.mxu0 %v528
        %547 = vmatprep.subr.bf16.mxu0 0
        %548 = vmatpush1.bf16.msra.mxu0 %v529
        %549 = vmatprep.subr.bf16.mxu0 0
        %550 = vmatpush1.bf16.msra.mxu0 %v530
        %551 = vmatprep.subr.bf16.mxu0 0
        %552 = vmatpush1.bf16.msra.mxu0 %v531
        %553 = vmatprep.subr.bf16.mxu0 0
        %554 = vmatpush1.bf16.msra.mxu0 %v532
        %555 = vmatprep.subr.bf16.mxu0 0
        %556 = vmatpush1.bf16.msra.mxu0 %v533
        %557 = vmatprep.subr.bf16.mxu0 0
        %558 = vmatpush1.bf16.msra.mxu0 %v534
        %559 = vmatprep.subr.bf16.mxu0 0
        %560 = vmatpush1.bf16.msra.mxu0 0
        %561 = vmatprep.subr.bf16.mxu0 0
        %562 = vmatpush1.bf16.msra.mxu0 0
        %563 = vmatprep.subr.bf16.mxu0 0
        %564 = vmatpush1.bf16.msra.mxu0 0
        %565 = vmatprep.subr.bf16.mxu0 0
        %566 = vmatpush1.bf16.msra.mxu0 0
        %567 = vmatprep.subr.bf16.mxu0 0
        %568 = vmatpush1.bf16.msra.mxu0 0
        %569 = vmatprep.subr.bf16.mxu0 0
        %570 = vmatpush1.bf16.msra.mxu0 0
        %571 = vmatprep.subr.bf16.mxu0 0
        %572 = vmatpush1.bf16.msra.mxu0 0
        %573 = vmatprep.subr.bf16.mxu0 0
        %574 = vmatpush1.bf16.msra.mxu0 0
        %575 = vmatprep.mubr.bf16.mxu0 0
        %576 = vmatmul.mubr.bf16.gmra.mrb[0].mxu0 %v473
        %v577 = vpop.f32.mrb[0].mxu0
        %v578 = vadd.f32 %v494, %v577
        %v579 = vpop.f32.mrb[0].mxu0
        %v580 = vpop.f32.mrb[0].mxu0
        %v581 = vadd.f32 %v494, %v580
        %v582 = vpop.f32.mrb[0].mxu0
        %583 = vmatprep.mubr.bf16.mxu0 0
        %584 = vmatmul.mubr.bf16.gmra.mrb[0].mxu0 %v474
        %v585 = vpop.f32.mrb[0].mxu0
        %v586 = vadd.f32 %v494, %v585
        %v587 = vpop.f32.mrb[0].mxu0
        %v588 = vpop.f32.mrb[0].mxu0
        %v589 = vadd.f32 %v494, %v588
        %v590 = vpop.f32.mrb[0].mxu0
        %591 = vdwg.mxu0
        %v592 = vpack.c.bf16 %v581, %v578
        %v593 = vpack.c.bf16 %v589, %v586
        %v594 = vlaneseq
        %v595 = vshrl.u32 %v594, 7
        %v596 = vadd.s32 %v595, 8
        %vm597 = vcmp.gt.s32.totalorder %v471, %v595
        %vm598 = vcmp.gt.s32.totalorder %v471, %v596
        %v599 = vsel %vm597, -10000.0, 0.0
        %v600 = vsel %vm598, -10000.0, 0.0
        %v601 = vld [vmem:[%s379] sm:$0xf]
        %v602 = vld [vmem:[%s379 + $0x4] sm:$0xf]
        %v603 = vld [vmem:[%s379 + $0x8] sm:$0xf]
        %v604 = vld [vmem:[%s379 + $0xc] sm:$0xf]
        %606 = vrot.lane.b32.xlu0 %v592, 96
        %v607 = vpop.permute.xlu0 %606
        %vm608 = vcmask 64512
        %v610 = vsel %vm608, %v592, 0
        %v613 = vsel %vm608, %v607, 0
        %615 = vmatprep.subr.bf16.mxu0 0
        %616 = vmatpush1.bf16.xpose.msra.mxu0 %v613
        %617 = vmatprep.subr.bf16.mxu0 0
        %618 = vmatpush1.bf16.xpose.msra.mxu0 0
        %619 = vmatprep.subr.bf16.mxu0 0
        %620 = vmatpush1.bf16.xpose.msra.mxu0 0
        %621 = vmatprep.subr.bf16.mxu0 0
        %622 = vmatpush1.bf16.xpose.msra.mxu0 0
        %623 = vmatprep.subr.bf16.mxu0 0
        %624 = vmatpush1.bf16.xpose.msra.mxu0 0
        %625 = vmatprep.subr.bf16.mxu0 0
        %626 = vmatpush1.bf16.xpose.msra.mxu0 0
        %627 = vmatprep.subr.bf16.mxu0 0
        %628 = vmatpush1.bf16.xpose.msra.mxu0 0
        %629 = vmatprep.subr.bf16.mxu0 0
        %630 = vmatpush1.bf16.xpose.msra.mxu0 0
        %631 = vmatprep.subr.bf16.mxu0 0
        %632 = vmatpush1.bf16.xpose.msra.mxu0 0
        %633 = vmatprep.subr.bf16.mxu0 0
        %634 = vmatpush1.bf16.xpose.msra.mxu0 0
        %635 = vmatprep.subr.bf16.mxu0 0
        %636 = vmatpush1.bf16.xpose.msra.mxu0 0
        %637 = vmatprep.subr.bf16.mxu0 0
        %638 = vmatpush1.bf16.xpose.msra.mxu0 0
        %639 = vmatprep.subr.bf16.mxu0 0
        %640 = vmatpush1.bf16.xpose.msra.mxu0 0
        %641 = vmatprep.subr.bf16.mxu0 0
        %642 = vmatpush1.bf16.xpose.msra.mxu0 0
        %643 = vmatprep.subr.bf16.mxu0 0
        %644 = vmatpush1.bf16.xpose.msra.mxu0 0
        %645 = vmatprep.subr.bf16.mxu0 0
        %646 = vmatpush1.bf16.xpose.msra.mxu0 0
        %647 = vmatprep.mubr.bf16.mxu0 0
        %648 = vmatmul.mubr.bf16.gmra.mrb[0].mxu0 %v610
        %v649 = vpop.f32.mrb[0].mxu0
        %v650 = vadd.f32 %v599, %v649
        %v651 = vpop.f32.mrb[0].mxu0
        %v652 = vpop.f32.mrb[0].mxu0
        %v653 = vadd.f32 %v600, %v652
        %v654 = vpop.f32.mrb[0].mxu0
        %655 = vdwg.mxu0
        %vm656 = vcmask 130048
        %v657 = vsel %vm656, %v650, -inf
        %658 = vmax.xlane.f32.xlu0 %v657
        %v659 = vpop.xlane.xlu0 %658
        %v660 = vsel %vm656, %v653, -inf
        %661 = vmax.xlane.f32.xlu0 %v660
        %v662 = vpop.xlane.xlu0 %661
        %v663 = vsub.f32 %v650, %v659
        %v664 = vsub.f32 %v653, %v662
        %v665 = vmul.f32 %v663, 1.442695
        %v666 = vpow.pop %v665
        %v667 = vmul.f32 %v664, 1.442695
        %v668 = vpow.pop %v667
        %v669 = vsel %vm656, %v666, 0.0
        %670 = vadd.xlane.f32.xlu0 %v669
        %v671 = vpop.xlane.xlu0 %670
        %v672 = vsel %vm656, %v668, 0.0
        %673 = vadd.xlane.f32.xlu0 %v672
        %v674 = vpop.xlane.xlu0 %673
        %v675 = vrcp.pop %v671
        %v676 = vrcp.pop %v674
        %v677 = vmul.f32 %v666, %v675
        %v678 = vmul.f32 %v668, %v676
        %v679 = vpack.c.bf16 %v678, %v677
        %680 = vrot.lane.b32.xlu0 %v592, 64
        %v681 = vpop.permute.xlu0 %680
        %v684 = vsel %vm656, %v679, 0
        %686 = vmatprep.subr.bf16.mxu0 0
        %687 = vmatpush1.bf16.msra.mxu0 %v681
        %688 = vmatprep.subr.bf16.mxu0 0
        %689 = vmatpush1.bf16.msra.mxu0 0
        %690 = vmatprep.subr.bf16.mxu0 0
        %691 = vmatpush1.bf16.msra.mxu0 0
        %692 = vmatprep.subr.bf16.mxu0 0
        %693 = vmatpush1.bf16.msra.mxu0 0
        %694 = vmatprep.subr.bf16.mxu0 0
        %695 = vmatpush1.bf16.msra.mxu0 0
        %696 = vmatprep.subr.bf16.mxu0 0
        %697 = vmatpush1.bf16.msra.mxu0 0
        %698 = vmatprep.subr.bf16.mxu0 0
        %699 = vmatpush1.bf16.msra.mxu0 0
        %700 = vmatprep.subr.bf16.mxu0 0
        %701 = vmatpush1.bf16.msra.mxu0 0
        %702 = vmatprep.subr.bf16.mxu0 0
        %703 = vmatpush1.bf16.msra.mxu0 0
        %704 = vmatprep.subr.bf16.mxu0 0
        %705 = vmatpush1.bf16.msra.mxu0 0
        %706 = vmatprep.subr.bf16.mxu0 0
        %707 = vmatpush1.bf16.msra.mxu0 0
        %708 = vmatprep.subr.bf16.mxu0 0
        %709 = vmatpush1.bf16.msra.mxu0 0
        %710 = vmatprep.subr.bf16.mxu0 0
        %711 = vmatpush1.bf16.msra.mxu0 0
        %712 = vmatprep.subr.bf16.mxu0 0
        %713 = vmatpush1.bf16.msra.mxu0 0
        %714 = vmatprep.subr.bf16.mxu0 0
        %715 = vmatpush1.bf16.msra.mxu0 0
        %716 = vmatprep.subr.bf16.mxu0 0
        %717 = vmatpush1.bf16.msra.mxu0 0
        %718 = vmatprep.mubr.bf16.mxu0 0
        %719 = vmatmul.mubr.bf16.gmra.mrb[0].mxu0 %v684
        %v720 = vpop.f32.mrb[0].mxu0
        %v721 = vadd.f32 0.0, %v720
        %v722 = vpop.f32.mrb[0].mxu0
        %v723 = vpop.f32.mrb[0].mxu0
        %v724 = vadd.f32 0.0, %v723
        %v725 = vpop.f32.mrb[0].mxu0
        %726 = vdwg.mxu0
        %v727 = vpack.c.bf16 %v724, %v721
        %728 = vrot.lane.b32.xlu0 %v592, 120
        %v729 = vpop.permute.xlu0 %728
        %730 = vrot.lane.b32.xlu0 %v592, 88
        %v731 = vpop.permute.xlu0 %730
        %v733 = vsel %vm608, %v729, 0
        %v736 = vsel %vm608, %v731, 0
        %738 = vmatprep.subr.bf16.mxu0 0
        %739 = vmatpush1.bf16.xpose.msra.mxu0 %v736
        %740 = vmatprep.subr.bf16.mxu0 0
        %741 = vmatpush1.bf16.xpose.msra.mxu0 0
        %742 = vmatprep.subr.bf16.mxu0 0
        %743 = vmatpush1.bf16.xpose.msra.mxu0 0
        %744 = vmatprep.subr.bf16.mxu0 0
        %745 = vmatpush1.bf16.xpose.msra.mxu0 0
        %746 = vmatprep.subr.bf16.mxu0 0
        %747 = vmatpush1.bf16.xpose.msra.mxu0 0
        %748 = vmatprep.subr.bf16.mxu0 0
        %749 = vmatpush1.bf16.xpose.msra.mxu0 0
        %750 = vmatprep.subr.bf16.mxu0 0
        %751 = vmatpush1.bf16.xpose.msra.mxu0 0
        %752 = vmatprep.subr.bf16.mxu0 0
        %753 = vmatpush1.bf16.xpose.msra.mxu0 0
        %754 = vmatprep.subr.bf16.mxu0 0
        %755 = vmatpush1.bf16.xpose.msra.mxu0 0
        %756 = vmatprep.subr.bf16.mxu0 0
        %757 = vmatpush1.bf16.xpose.msra.mxu0 0
        %758 = vmatprep.subr.bf16.mxu0 0
        %759 = vmatpush1.bf16.xpose.msra.mxu0 0
        %760 = vmatprep.subr.bf16.mxu0 0
        %761 = vmatpush1.bf16.xpose.msra.mxu0 0
        %762 = vmatprep.subr.bf16.mxu0 0
        %763 = vmatpush1.bf16.xpose.msra.mxu0 0
        %764 = vmatprep.subr.bf16.mxu0 0
        %765 = vmatpush1.bf16.xpose.msra.mxu0 0
        %766 = vmatprep.subr.bf16.mxu0 0
        %767 = vmatpush1.bf16.xpose.msra.mxu0 0
        %768 = vmatprep.subr.bf16.mxu0 0
        %769 = vmatpush1.bf16.xpose.msra.mxu0 0
        %770 = vmatprep.mubr.bf16.mxu0 0
        %771 = vmatmul.mubr.bf16.gmra.mrb[0].mxu0 %v733
        %v772 = vpop.f32.mrb[0].mxu0
        %v773 = vadd.f32 %v599, %v772
        %v774 = vpop.f32.mrb[0].mxu0
        %v775 = vpop.f32.mrb[0].mxu0
        %v776 = vadd.f32 %v600, %v775
        %v777 = vpop.f32.mrb[0].mxu0
        %778 = vdwg.mxu0
        %v779 = vsel %vm656, %v773, -inf
        %780 = vmax.xlane.f32.xlu0 %v779
        %v781 = vpop.xlane.xlu0 %780
        %v782 = vsel %vm656, %v776, -inf
        %783 = vmax.xlane.f32.xlu0 %v782
        %v784 = vpop.xlane.xlu0 %783
        %v785 = vsub.f32 %v773, %v781
        %v786 = vsub.f32 %v776, %v784
        %v787 = vmul.f32 %v785, 1.442695
        %v788 = vpow.pop %v787
        %v789 = vmul.f32 %v786, 1.442695
        %v790 = vpow.pop %v789
        %v791 = vsel %vm656, %v788, 0.0
        %792 = vadd.xlane.f32.xlu0 %v791
        %v793 = vpop.xlane.xlu0 %792
        %v794 = vsel %vm656, %v790, 0.0
        %795 = vadd.xlane.f32.xlu0 %v794
        %v796 = vpop.xlane.xlu0 %795
        %v797 = vrcp.pop %v793
        %v798 = vrcp.pop %v796
        %v799 = vmul.f32 %v788, %v797
        %v800 = vmul.f32 %v790, %v798
        %v801 = vpack.c.bf16 %v800, %v799
        %802 = vrot.lane.b32.xlu0 %v592, 56
        %v803 = vpop.permute.xlu0 %802
        %v806 = vsel %vm656, %v801, 0
        %808 = vmatprep.subr.bf16.mxu0 0
        %809 = vmatpush1.bf16.msra.mxu0 %v803
        %810 = vmatprep.subr.bf16.mxu0 0
        %811 = vmatpush1.bf16.msra.mxu0 0
        %812 = vmatprep.subr.bf16.mxu0 0
        %813 = vmatpush1.bf16.msra.mxu0 0
        %814 = vmatprep.subr.bf16.mxu0 0
        %815 = vmatpush1.bf16.msra.mxu0 0
        %816 = vmatprep.subr.bf16.mxu0 0
        %817 = vmatpush1.bf16.msra.mxu0 0
        %818 = vmatprep.subr.bf16.mxu0 0
        %819 = vmatpush1.bf16.msra.mxu0 0
        %820 = vmatprep.subr.bf16.mxu0 0
        %821 = vmatpush1.bf16.msra.mxu0 0
        %822 = vmatprep.subr.bf16.mxu0 0
        %823 = vmatpush1.bf16.msra.mxu0 0
        %824 = vmatprep.subr.bf16.mxu0 0
        %825 = vmatpush1.bf16.msra.mxu0 0
        %826 = vmatprep.subr.bf16.mxu0 0
        %827 = vmatpush1.bf16.msra.mxu0 0
        %828 = vmatprep.subr.bf16.mxu0 0
        %829 = vmatpush1.bf16.msra.mxu0 0
        %830 = vmatprep.subr.bf16.mxu0 0
        %831 = vmatpush1.bf16.msra.mxu0 0
        %832 = vmatprep.subr.bf16.mxu0 0
        %833 = vmatpush1.bf16.msra.mxu0 0
        %834 = vmatprep.subr.bf16.mxu0 0
        %835 = vmatpush1.bf16.msra.mxu0 0
        %836 = vmatprep.subr.bf16.mxu0 0
        %837 = vmatpush1.bf16.msra.mxu0 0
        %838 = vmatprep.subr.bf16.mxu0 0
        %839 = vmatpush1.bf16.msra.mxu0 0
        %840 = vmatprep.mubr.bf16.mxu0 0
        %841 = vmatmul.mubr.bf16.gmra.mrb[0].mxu0 %v806
        %v842 = vpop.f32.mrb[0].mxu0
        %v843 = vadd.f32 0.0, %v842
        %v844 = vpop.f32.mrb[0].mxu0
        %v845 = vpop.f32.mrb[0].mxu0
        %v846 = vadd.f32 0.0, %v845
        %v847 = vpop.f32.mrb[0].mxu0
        %848 = vdwg.mxu0
        %v849 = vpack.c.bf16 %v846, %v843
        %v851 = vsel %vm608, %v849, 0
        %vm853 = vcmask 1043456
        %v855 = vsel %vm853, %v602, 0
        %857 = vmatprep.subr.bf16.mxu0 0
        %858 = vmatpush1.bf16.msra.mxu0 %v855
        %859 = vmatprep.subr.bf16.mxu0 0
        %860 = vmatpush1.bf16.msra.mxu0 0
        %861 = vmatprep.subr.bf16.mxu0 0
        %862 = vmatpush1.bf16.msra.mxu0 0
        %863 = vmatprep.subr.bf16.mxu0 0
        %864 = vmatpush1.bf16.msra.mxu0 0
        %865 = vmatprep.subr.bf16.mxu0 0
        %866 = vmatpush1.bf16.msra.mxu0 0
        %867 = vmatprep.subr.bf16.mxu0 0
        %868 = vmatpush1.bf16.msra.mxu0 0
        %869 = vmatprep.subr.bf16.mxu0 0
        %870 = vmatpush1.bf16.msra.mxu0 0
        %871 = vmatprep.subr.bf16.mxu0 0
        %872 = vmatpush1.bf16.msra.mxu0 0
        %873 = vmatprep.subr.bf16.mxu0 0
        %874 = vmatpush1.bf16.msra.mxu0 0
        %875 = vmatprep.subr.bf16.mxu0 0
        %876 = vmatpush1.bf16.msra.mxu0 0
        %877 = vmatprep.subr.bf16.mxu0 0
        %878 = vmatpush1.bf16.msra.mxu0 0
        %879 = vmatprep.subr.bf16.mxu0 0
        %880 = vmatpush1.bf16.msra.mxu0 0
        %881 = vmatprep.subr.bf16.mxu0 0
        %882 = vmatpush1.bf16.msra.mxu0 0
        %883 = vmatprep.subr.bf16.mxu0 0
        %884 = vmatpush1.bf16.msra.mxu0 0
        %885 = vmatprep.subr.bf16.mxu0 0
        %886 = vmatpush1.bf16.msra.mxu0 0
        %887 = vmatprep.subr.bf16.mxu0 0
        %888 = vmatpush1.bf16.msra.mxu0 0
        %889 = vmatprep.mubr.bf16.mxu0 0
        %890 = vmatmul.mubr.bf16.gmra.mrb[0].mxu0 %v851
        %v891 = vpop.f32.mrb[0].mxu0
        %v892 = vadd.f32 0.0, %v891
        %v893 = vpop.f32.mrb[0].mxu0
        %v894 = vpop.f32.mrb[0].mxu0
        %v895 = vadd.f32 0.0, %v894
        %v896 = vpop.f32.mrb[0].mxu0
        %897 = vdwg.mxu0
        %v899 = vsel %vm608, %v727, 0
        %v902 = vsel %vm853, %v601, 0
        %904 = vmatprep.subr.bf16.mxu0 0
        %905 = vmatpush1.bf16.msra.mxu0 %v902
        %906 = vmatprep.subr.bf16.mxu0 0
        %907 = vmatpush1.bf16.msra.mxu0 0
        %908 = vmatprep.subr.bf16.mxu0 0
        %909 = vmatpush1.bf16.msra.mxu0 0
        %910 = vmatprep.subr.bf16.mxu0 0
        %911 = vmatpush1.bf16.msra.mxu0 0
        %912 = vmatprep.subr.bf16.mxu0 0
        %913 = vmatpush1.bf16.msra.mxu0 0
        %914 = vmatprep.subr.bf16.mxu0 0
        %915 = vmatpush1.bf16.msra.mxu0 0
        %916 = vmatprep.subr.bf16.mxu0 0
        %917 = vmatpush1.bf16.msra.mxu0 0
        %918 = vmatprep.subr.bf16.mxu0 0
        %919 = vmatpush1.bf16.msra.mxu0 0
        %920 = vmatprep.subr.bf16.mxu0 0
        %921 = vmatpush1.bf16.msra.mxu0 0
        %922 = vmatprep.subr.bf16.mxu0 0
        %923 = vmatpush1.bf16.msra.mxu0 0
        %924 = vmatprep.subr.bf16.mxu0 0
        %925 = vmatpush1.bf16.msra.mxu0 0
        %926 = vmatprep.subr.bf16.mxu0 0
        %927 = vmatpush1.bf16.msra.mxu0 0
        %928 = vmatprep.subr.bf16.mxu0 0
        %929 = vmatpush1.bf16.msra.mxu0 0
        %930 = vmatprep.subr.bf16.mxu0 0
        %931 = vmatpush1.bf16.msra.mxu0 0
        %932 = vmatprep.subr.bf16.mxu0 0
        %933 = vmatpush1.bf16.msra.mxu0 0
        %934 = vmatprep.subr.bf16.mxu0 0
        %935 = vmatpush1.bf16.msra.mxu0 0
        %936 = vmatprep.mubr.bf16.mxu0 0
        %937 = vmatmul.mubr.bf16.gmra.mrb[0].mxu0 %v899
        %v938 = vpop.f32.mrb[0].mxu0
        %v939 = vadd.f32 %v892, %v938
        %v940 = vpop.f32.mrb[0].mxu0
        %v941 = vpop.f32.mrb[0].mxu0
        %v942 = vadd.f32 %v895, %v941
        %v943 = vpop.f32.mrb[0].mxu0
        %944 = vdwg.mxu0
        %945 = vrot.lane.b32.xlu0 %v592, 112
        %v946 = vpop.permute.xlu0 %945
        %947 = vrot.lane.b32.xlu0 %v592, 80
        %v948 = vpop.permute.xlu0 %947
        %v950 = vsel %vm608, %v946, 0
        %v953 = vsel %vm608, %v948, 0
        %955 = vmatprep.subr.bf16.mxu0 0
        %956 = vmatpush1.bf16.xpose.msra.mxu0 %v953
        %957 = vmatprep.subr.bf16.mxu0 0
        %958 = vmatpush1.bf16.xpose.msra.mxu0 0
        %959 = vmatprep.subr.bf16.mxu0 0
        %960 = vmatpush1.bf16.xpose.msra.mxu0 0
        %961 = vmatprep.subr.bf16.mxu0 0
        %962 = vmatpush1.bf16.xpose.msra.mxu0 0
        %963 = vmatprep.subr.bf16.mxu0 0
        %964 = vmatpush1.bf16.xpose.msra.mxu0 0
        %965 = vmatprep.subr.bf16.mxu0 0
        %966 = vmatpush1.bf16.xpose.msra.mxu0 0
        %967 = vmatprep.subr.bf16.mxu0 0
        %968 = vmatpush1.bf16.xpose.msra.mxu0 0
        %969 = vmatprep.subr.bf16.mxu0 0
        %970 = vmatpush1.bf16.xpose.msra.mxu0 0
        %971 = vmatprep.subr.bf16.mxu0 0
        %972 = vmatpush1.bf16.xpose.msra.mxu0 0
        %973 = vmatprep.subr.bf16.mxu0 0
        %974 = vmatpush1.bf16.xpose.msra.mxu0 0
        %975 = vmatprep.subr.bf16.mxu0 0
        %976 = vmatpush1.bf16.xpose.msra.mxu0 0
        %977 = vmatprep.subr.bf16.mxu0 0
        %978 = vmatpush1.bf16.xpose.msra.mxu0 0
        %979 = vmatprep.subr.bf16.mxu0 0
        %980 = vmatpush1.bf16.xpose.msra.mxu0 0
        %981 = vmatprep.subr.bf16.mxu0 0
        %982 = vmatpush1.bf16.xpose.msra.mxu0 0
        %983 = vmatprep.subr.bf16.mxu0 0
        %984 = vmatpush1.bf16.xpose.msra.mxu0 0
        %985 = vmatprep.subr.bf16.mxu0 0
        %986 = vmatpush1.bf16.xpose.msra.mxu0 0
        %987 = vmatprep.mubr.bf16.mxu0 0
        %988 = vmatmul.mubr.bf16.gmra.mrb[0].mxu0 %v950
        %v989 = vpop.f32.mrb[0].mxu0
        %v990 = vadd.f32 %v599, %v989
        %v991 = vpop.f32.mrb[0].mxu0
        %v992 = vpop.f32.mrb[0].mxu0
        %v993 = vadd.f32 %v600, %v992
        %v994 = vpop.f32.mrb[0].mxu0
        %995 = vdwg.mxu0
        %v996 = vsel %vm656, %v990, -inf
        %997 = vmax.xlane.f32.xlu0 %v996
        %v998 = vpop.xlane.xlu0 %997
        %v999 = vsel %vm656, %v993, -inf
        %1000 = vmax.xlane.f32.xlu0 %v999
        %v1001 = vpop.xlane.xlu0 %1000
        %v1002 = vsub.f32 %v990, %v998
        %v1003 = vsub.f32 %v993, %v1001
        %v1004 = vmul.f32 %v1002, 1.442695
        %v1005 = vpow.pop %v1004
        %v1006 = vmul.f32 %v1003, 1.442695
        %v1007 = vpow.pop %v1006
        %v1008 = vsel %vm656, %v1005, 0.0
        %1009 = vadd.xlane.f32.xlu0 %v1008
        %v1010 = vpop.xlane.xlu0 %1009
        %v1011 = vsel %vm656, %v1007, 0.0
        %1012 = vadd.xlane.f32.xlu0 %v1011
        %v1013 = vpop.xlane.xlu0 %1012
        %v1014 = vrcp.pop %v1010
        %v1015 = vrcp.pop %v1013
        %v1016 = vmul.f32 %v1005, %v1014
        %v1017 = vmul.f32 %v1007, %v1015
        %v1018 = vpack.c.bf16 %v1017, %v1016
        %1019 = vrot.lane.b32.xlu0 %v592, 48
        %v1020 = vpop.permute.xlu0 %1019
        %v1023 = vsel %vm656, %v1018, 0
        %1025 = vmatprep.subr.bf16.mxu0 0
        %1026 = vmatpush1.bf16.msra.mxu0 %v1020
        %1027 = vmatprep.subr.bf16.mxu0 0
        %1028 = vmatpush1.bf16.msra.mxu0 0
        %1029 = vmatprep.subr.bf16.mxu0 0
        %1030 = vmatpush1.bf16.msra.mxu0 0
        %1031 = vmatprep.subr.bf16.mxu0 0
        %1032 = vmatpush1.bf16.msra.mxu0 0
        %1033 = vmatprep.subr.bf16.mxu0 0
        %1034 = vmatpush1.bf16.msra.mxu0 0
        %1035 = vmatprep.subr.bf16.mxu0 0
        %1036 = vmatpush1.bf16.msra.mxu0 0
        %1037 = vmatprep.subr.bf16.mxu0 0
        %1038 = vmatpush1.bf16.msra.mxu0 0
        %1039 = vmatprep.subr.bf16.mxu0 0
        %1040 = vmatpush1.bf16.msra.mxu0 0
        %1041 = vmatprep.subr.bf16.mxu0 0
        %1042 = vmatpush1.bf16.msra.mxu0 0
        %1043 = vmatprep.subr.bf16.mxu0 0
        %1044 = vmatpush1.bf16.msra.mxu0 0
        %1045 = vmatprep.subr.bf16.mxu0 0
        %1046 = vmatpush1.bf16.msra.mxu0 0
        %1047 = vmatprep.subr.bf16.mxu0 0
        %1048 = vmatpush1.bf16.msra.mxu0 0
        %1049 = vmatprep.subr.bf16.mxu0 0
        %1050 = vmatpush1.bf16.msra.mxu0 0
        %1051 = vmatprep.subr.bf16.mxu0 0
        %1052 = vmatpush1.bf16.msra.mxu0 0
        %1053 = vmatprep.subr.bf16.mxu0 0
        %1054 = vmatpush1.bf16.msra.mxu0 0
        %1055 = vmatprep.subr.bf16.mxu0 0
        %1056 = vmatpush1.bf16.msra.mxu0 0
        %1057 = vmatprep.mubr.bf16.mxu0 0
        %1058 = vmatmul.mubr.bf16.gmra.mrb[0].mxu0 %v1023
        %v1059 = vpop.f32.mrb[0].mxu0
        %v1060 = vadd.f32 0.0, %v1059
        %v1061 = vpop.f32.mrb[0].mxu0
        %v1062 = vpop.f32.mrb[0].mxu0
        %v1063 = vadd.f32 0.0, %v1062
        %v1064 = vpop.f32.mrb[0].mxu0
        %1065 = vdwg.mxu0
        %v1066 = vpack.c.bf16 %v1063, %v1060
        %v1068 = vsel %vm608, %v1066, 0
        %v1071 = vsel %vm853, %v603, 0
        %1073 = vmatprep.subr.bf16.mxu0 0
        %1074 = vmatpush1.bf16.msra.mxu0 %v1071
        %1075 = vmatprep.subr.bf16.mxu0 0
        %1076 = vmatpush1.bf16.msra.mxu0 0
        %1077 = vmatprep.subr.bf16.mxu0 0
        %1078 = vmatpush1.bf16.msra.mxu0 0
        %1079 = vmatprep.subr.bf16.mxu0 0
        %1080 = vmatpush1.bf16.msra.mxu0 0
        %1081 = vmatprep.subr.bf16.mxu0 0
        %1082 = vmatpush1.bf16.msra.mxu0 0
        %1083 = vmatprep.subr.bf16.mxu0 0
        %1084 = vmatpush1.bf16.msra.mxu0 0
        %1085 = vmatprep.subr.bf16.mxu0 0
        %1086 = vmatpush1.bf16.msra.mxu0 0
        %1087 = vmatprep.subr.bf16.mxu0 0
        %1088 = vmatpush1.bf16.msra.mxu0 0
        %1089 = vmatprep.subr.bf16.mxu0 0
        %1090 = vmatpush1.bf16.msra.mxu0 0
        %1091 = vmatprep.subr.bf16.mxu0 0
        %1092 = vmatpush1.bf16.msra.mxu0 0
        %1093 = vmatprep.subr.bf16.mxu0 0
        %1094 = vmatpush1.bf16.msra.mxu0 0
        %1095 = vmatprep.subr.bf16.mxu0 0
        %1096 = vmatpush1.bf16.msra.mxu0 0
        %1097 = vmatprep.subr.bf16.mxu0 0
        %1098 = vmatpush1.bf16.msra.mxu0 0
        %1099 = vmatprep.subr.bf16.mxu0 0
        %1100 = vmatpush1.bf16.msra.mxu0 0
        %1101 = vmatprep.subr.bf16.mxu0 0
        %1102 = vmatpush1.bf16.msra.mxu0 0
        %1103 = vmatprep.subr.bf16.mxu0 0
        %1104 = vmatpush1.bf16.msra.mxu0 0
        %1105 = vmatprep.mubr.bf16.mxu0 0
        %1106 = vmatmul.mubr.bf16.gmra.mrb[0].mxu0 %v1068
        %v1107 = vpop.f32.mrb[0].mxu0
        %v1108 = vadd.f32 0.0, %v1107
        %v1109 = vpop.f32.mrb[0].mxu0
        %v1110 = vpop.f32.mrb[0].mxu0
        %v1111 = vadd.f32 0.0, %v1110
        %v1112 = vpop.f32.mrb[0].mxu0
        %1113 = vdwg.mxu0
        %v1114 = vadd.f32 %v939, %v1108
        %v1115 = vadd.f32 %v942, %v1111
        %1116 = vrot.lane.b32.xlu0 %v592, 104
        %v1117 = vpop.permute.xlu0 %1116
        %1118 = vrot.lane.b32.xlu0 %v592, 72
        %v1119 = vpop.permute.xlu0 %1118
        %v1121 = vsel %vm608, %v1117, 0
        %v1124 = vsel %vm608, %v1119, 0
        %1126 = vmatprep.subr.bf16.mxu0 0
        %1127 = vmatpush1.bf16.xpose.msra.mxu0 %v1124
        %1128 = vmatprep.subr.bf16.mxu0 0
        %1129 = vmatpush1.bf16.xpose.msra.mxu0 0
        %1130 = vmatprep.subr.bf16.mxu0 0
        %1131 = vmatpush1.bf16.xpose.msra.mxu0 0
        %1132 = vmatprep.subr.bf16.mxu0 0
        %1133 = vmatpush1.bf16.xpose.msra.mxu0 0
        %1134 = vmatprep.subr.bf16.mxu0 0
        %1135 = vmatpush1.bf16.xpose.msra.mxu0 0
        %1136 = vmatprep.subr.bf16.mxu0 0
        %1137 = vmatpush1.bf16.xpose.msra.mxu0 0
        %1138 = vmatprep.subr.bf16.mxu0 0
        %1139 = vmatpush1.bf16.xpose.msra.mxu0 0
        %1140 = vmatprep.subr.bf16.mxu0 0
        %1141 = vmatpush1.bf16.xpose.msra.mxu0 0
        %1142 = vmatprep.subr.bf16.mxu0 0
        %1143 = vmatpush1.bf16.xpose.msra.mxu0 0
        %1144 = vmatprep.subr.bf16.mxu0 0
        %1145 = vmatpush1.bf16.xpose.msra.mxu0 0
        %1146 = vmatprep.subr.bf16.mxu0 0
        %1147 = vmatpush1.bf16.xpose.msra.mxu0 0
        %1148 = vmatprep.subr.bf16.mxu0 0
        %1149 = vmatpush1.bf16.xpose.msra.mxu0 0
        %1150 = vmatprep.subr.bf16.mxu0 0
        %1151 = vmatpush1.bf16.xpose.msra.mxu0 0
        %1152 = vmatprep.subr.bf16.mxu0 0
        %1153 = vmatpush1.bf16.xpose.msra.mxu0 0
        %1154 = vmatprep.subr.bf16.mxu0 0
        %1155 = vmatpush1.bf16.xpose.msra.mxu0 0
        %1156 = vmatprep.subr.bf16.mxu0 0
        %1157 = vmatpush1.bf16.xpose.msra.mxu0 0
        %1158 = vmatprep.mubr.bf16.mxu0 0
        %1159 = vmatmul.mubr.bf16.gmra.mrb[0].mxu0 %v1121
        %v1160 = vpop.f32.mrb[0].mxu0
        %v1161 = vadd.f32 %v599, %v1160
        %v1162 = vpop.f32.mrb[0].mxu0
        %v1163 = vpop.f32.mrb[0].mxu0
        %v1164 = vadd.f32 %v600, %v1163
        %v1165 = vpop.f32.mrb[0].mxu0
        %1166 = vdwg.mxu0
        %v1167 = vsel %vm656, %v1161, -inf
        %1168 = vmax.xlane.f32.xlu0 %v1167
        %v1169 = vpop.xlane.xlu0 %1168
        %v1170 = vsel %vm656, %v1164, -inf
        %1171 = vmax.xlane.f32.xlu0 %v1170
        %v1172 = vpop.xlane.xlu0 %1171
        %v1173 = vsub.f32 %v1161, %v1169
        %v1174 = vsub.f32 %v1164, %v1172
        %v1175 = vmul.f32 %v1173, 1.442695
        %v1176 = vpow.pop %v1175
        %v1177 = vmul.f32 %v1174, 1.442695
        %v1178 = vpow.pop %v1177
        %v1179 = vsel %vm656, %v1176, 0.0
        %1180 = vadd.xlane.f32.xlu0 %v1179
        %v1181 = vpop.xlane.xlu0 %1180
        %v1182 = vsel %vm656, %v1178, 0.0
        %1183 = vadd.xlane.f32.xlu0 %v1182
        %v1184 = vpop.xlane.xlu0 %1183
        %v1185 = vrcp.pop %v1181
        %v1186 = vrcp.pop %v1184
        %v1187 = vmul.f32 %v1176, %v1185
        %v1188 = vmul.f32 %v1178, %v1186
        %v1189 = vpack.c.bf16 %v1188, %v1187
        %1190 = vrot.lane.b32.xlu0 %v592, 40
        %v1191 = vpop.permute.xlu0 %1190
        %v1194 = vsel %vm656, %v1189, 0
        %1196 = vmatprep.subr.bf16.mxu0 0
        %1197 = vmatpush1.bf16.msra.mxu0 %v1191
        %1198 = vmatprep.subr.bf16.mxu0 0
        %1199 = vmatpush1.bf16.msra.mxu0 0
        %1200 = vmatprep.subr.bf16.mxu0 0
        %1201 = vmatpush1.bf16.msra.mxu0 0
        %1202 = vmatprep.subr.bf16.mxu0 0
        %1203 = vmatpush1.bf16.msra.mxu0 0
        %1204 = vmatprep.subr.bf16.mxu0 0
        %1205 = vmatpush1.bf16.msra.mxu0 0
        %1206 = vmatprep.subr.bf16.mxu0 0
        %1207 = vmatpush1.bf16.msra.mxu0 0
        %1208 = vmatprep.subr.bf16.mxu0 0
        %1209 = vmatpush1.bf16.msra.mxu0 0
        %1210 = vmatprep.subr.bf16.mxu0 0
        %1211 = vmatpush1.bf16.msra.mxu0 0
        %1212 = vmatprep.subr.bf16.mxu0 0
        %1213 = vmatpush1.bf16.msra.mxu0 0
        %1214 = vmatprep.subr.bf16.mxu0 0
        %1215 = vmatpush1.bf16.msra.mxu0 0
        %1216 = vmatprep.subr.bf16.mxu0 0
        %1217 = vmatpush1.bf16.msra.mxu0 0
        %1218 = vmatprep.subr.bf16.mxu0 0
        %1219 = vmatpush1.bf16.msra.mxu0 0
        %1220 = vmatprep.subr.bf16.mxu0 0
        %1221 = vmatpush1.bf16.msra.mxu0 0
        %1222 = vmatprep.subr.bf16.mxu0 0
        %1223 = vmatpush1.bf16.msra.mxu0 0
        %1224 = vmatprep.subr.bf16.mxu0 0
        %1225 = vmatpush1.bf16.msra.mxu0 0
        %1226 = vmatprep.subr.bf16.mxu0 0
        %1227 = vmatpush1.bf16.msra.mxu0 0
        %1228 = vmatprep.mubr.bf16.mxu0 0
        %1229 = vmatmul.mubr.bf16.gmra.mrb[0].mxu0 %v1194
        %v1230 = vpop.f32.mrb[0].mxu0
        %v1231 = vadd.f32 0.0, %v1230
        %v1232 = vpop.f32.mrb[0].mxu0
        %v1233 = vpop.f32.mrb[0].mxu0
        %v1234 = vadd.f32 0.0, %v1233
        %v1235 = vpop.f32.mrb[0].mxu0
        %1236 = vdwg.mxu0
        %v1237 = vpack.c.bf16 %v1234, %v1231
        %v1239 = vsel %vm608, %v1237, 0
        %v1242 = vsel %vm853, %v604, 0
        %1244 = vmatprep.subr.bf16.mxu0 0
        %1245 = vmatpush1.bf16.msra.mxu0 %v1242
        %1246 = vmatprep.subr.bf16.mxu0 0
        %1247 = vmatpush1.bf16.msra.mxu0 0
        %1248 = vmatprep.subr.bf16.mxu0 0
        %1249 = vmatpush1.bf16.msra.mxu0 0
        %1250 = vmatprep.subr.bf16.mxu0 0
        %1251 = vmatpush1.bf16.msra.mxu0 0
        %1252 = vmatprep.subr.bf16.mxu0 0
        %1253 = vmatpush1.bf16.msra.mxu0 0
        %1254 = vmatprep.subr.bf16.mxu0 0
        %1255 = vmatpush1.bf16.msra.mxu0 0
        %1256 = vmatprep.subr.bf16.mxu0 0
        %1257 = vmatpush1.bf16.msra.mxu0 0
        %1258 = vmatprep.subr.bf16.mxu0 0
        %1259 = vmatpush1.bf16.msra.mxu0 0
        %1260 = vmatprep.subr.bf16.mxu0 0
        %1261 = vmatpush1.bf16.msra.mxu0 0
        %1262 = vmatprep.subr.bf16.mxu0 0
        %1263 = vmatpush1.bf16.msra.mxu0 0
        %1264 = vmatprep.subr.bf16.mxu0 0
        %1265 = vmatpush1.bf16.msra.mxu0 0
        %1266 = vmatprep.subr.bf16.mxu0 0
        %1267 = vmatpush1.bf16.msra.mxu0 0
        %1268 = vmatprep.subr.bf16.mxu0 0
        %1269 = vmatpush1.bf16.msra.mxu0 0
        %1270 = vmatprep.subr.bf16.mxu0 0
        %1271 = vmatpush1.bf16.msra.mxu0 0
        %1272 = vmatprep.subr.bf16.mxu0 0
        %1273 = vmatpush1.bf16.msra.mxu0 0
        %1274 = vmatprep.subr.bf16.mxu0 0
        %1275 = vmatpush1.bf16.msra.mxu0 0
        %1276 = vmatprep.mubr.bf16.mxu0 0
        %1277 = vmatmul.mubr.bf16.gmra.mrb[0].mxu0 %v1239
        %v1278 = vpop.f32.mrb[0].mxu0
        %v1279 = vadd.f32 0.0, %v1278
        %v1280 = vpop.f32.mrb[0].mxu0
        %v1281 = vpop.f32.mrb[0].mxu0
        %v1282 = vadd.f32 0.0, %v1281
        %v1283 = vpop.f32.mrb[0].mxu0
        %1284 = vdwg.mxu0
        %v1285 = vadd.f32 %v1114, %v1279
        %v1286 = vadd.f32 %v1115, %v1282
        %1288 = vrot.lane.b32.xlu0 %v593, 96
        %v1289 = vpop.permute.xlu0 %1288
        %v1291 = vsel %vm608, %v593, 0
        %v1294 = vsel %vm608, %v1289, 0
        %1296 = vmatprep.subr.bf16.mxu0 0
        %1297 = vmatpush1.bf16.xpose.msra.mxu0 %v1294
        %1298 = vmatprep.subr.bf16.mxu0 0
        %1299 = vmatpush1.bf16.xpose.msra.mxu0 0
        %1300 = vmatprep.subr.bf16.mxu0 0
        %1301 = vmatpush1.bf16.xpose.msra.mxu0 0
        %1302 = vmatprep.subr.bf16.mxu0 0
        %1303 = vmatpush1.bf16.xpose.msra.mxu0 0
        %1304 = vmatprep.subr.bf16.mxu0 0
        %1305 = vmatpush1.bf16.xpose.msra.mxu0 0
        %1306 = vmatprep.subr.bf16.mxu0 0
        %1307 = vmatpush1.bf16.xpose.msra.mxu0 0
        %1308 = vmatprep.subr.bf16.mxu0 0
        %1309 = vmatpush1.bf16.xpose.msra.mxu0 0
        %1310 = vmatprep.subr.bf16.mxu0 0
        %1311 = vmatpush1.bf16.xpose.msra.mxu0 0
        %1312 = vmatprep.subr.bf16.mxu0 0
        %1313 = vmatpush1.bf16.xpose.msra.mxu0 0
        %1314 = vmatprep.subr.bf16.mxu0 0
        %1315 = vmatpush1.bf16.xpose.msra.mxu0 0
        %1316 = vmatprep.subr.bf16.mxu0 0
        %1317 = vmatpush1.bf16.xpose.msra.mxu0 0
        %1318 = vmatprep.subr.bf16.mxu0 0
        %1319 = vmatpush1.bf16.xpose.msra.mxu0 0
        %1320 = vmatprep.subr.bf16.mxu0 0
        %1321 = vmatpush1.bf16.xpose.msra.mxu0 0
        %1322 = vmatprep.subr.bf16.mxu0 0
        %1323 = vmatpush1.bf16.xpose.msra.mxu0 0
        %1324 = vmatprep.subr.bf16.mxu0 0
        %1325 = vmatpush1.bf16.xpose.msra.mxu0 0
        %1326 = vmatprep.subr.bf16.mxu0 0
        %1327 = vmatpush1.bf16.xpose.msra.mxu0 0
        %1328 = vmatprep.mubr.bf16.mxu0 0
        %1329 = vmatmul.mubr.bf16.gmra.mrb[0].mxu0 %v1291
        %v1330 = vpop.f32.mrb[0].mxu0
        %v1331 = vadd.f32 %v599, %v1330
        %v1332 = vpop.f32.mrb[0].mxu0
        %v1333 = vpop.f32.mrb[0].mxu0
        %v1334 = vadd.f32 %v600, %v1333
        %v1335 = vpop.f32.mrb[0].mxu0
        %1336 = vdwg.mxu0
        %v1337 = vsel %vm656, %v1331, -inf
        %1338 = vmax.xlane.f32.xlu0 %v1337
        %v1339 = vpop.xlane.xlu0 %1338
        %v1340 = vsel %vm656, %v1334, -inf
        %1341 = vmax.xlane.f32.xlu0 %v1340
        %v1342 = vpop.xlane.xlu0 %1341
        %v1343 = vsub.f32 %v1331, %v1339
        %v1344 = vsub.f32 %v1334, %v1342
        %v1345 = vmul.f32 %v1343, 1.442695
        %v1346 = vpow.pop %v1345
        %v1347 = vmul.f32 %v1344, 1.442695
        %v1348 = vpow.pop %v1347
        %v1349 = vsel %vm656, %v1346, 0.0
        %1350 = vadd.xlane.f32.xlu0 %v1349
        %v1351 = vpop.xlane.xlu0 %1350
        %v1352 = vsel %vm656, %v1348, 0.0
        %1353 = vadd.xlane.f32.xlu0 %v1352
        %v1354 = vpop.xlane.xlu0 %1353
        %v1355 = vrcp.pop %v1351
        %v1356 = vrcp.pop %v1354
        %v1357 = vmul.f32 %v1346, %v1355
        %v1358 = vmul.f32 %v1348, %v1356
        %v1359 = vpack.c.bf16 %v1358, %v1357
        %1360 = vrot.lane.b32.xlu0 %v593, 64
        %v1361 = vpop.permute.xlu0 %1360
        %v1364 = vsel %vm656, %v1359, 0
        %1366 = vmatprep.subr.bf16.mxu0 0
        %1367 = vmatpush1.bf16.msra.mxu0 %v1361
        %1368 = vmatprep.subr.bf16.mxu0 0
        %1369 = vmatpush1.bf16.msra.mxu0 0
        %1370 = vmatprep.subr.bf16.mxu0 0
        %1371 = vmatpush1.bf16.msra.mxu0 0
        %1372 = vmatprep.subr.bf16.mxu0 0
        %1373 = vmatpush1.bf16.msra.mxu0 0
        %1374 = vmatprep.subr.bf16.mxu0 0
        %1375 = vmatpush1.bf16.msra.mxu0 0
        %1376 = vmatprep.subr.bf16.mxu0 0
        %1377 = vmatpush1.bf16.msra.mxu0 0
        %1378 = vmatprep.subr.bf16.mxu0 0
        %1379 = vmatpush1.bf16.msra.mxu0 0
        %1380 = vmatprep.subr.bf16.mxu0 0
        %1381 = vmatpush1.bf16.msra.mxu0 0
        %1382 = vmatprep.subr.bf16.mxu0 0
        %1383 = vmatpush1.bf16.msra.mxu0 0
        %1384 = vmatprep.subr.bf16.mxu0 0
        %1385 = vmatpush1.bf16.msra.mxu0 0
        %1386 = vmatprep.subr.bf16.mxu0 0
        %1387 = vmatpush1.bf16.msra.mxu0 0
        %1388 = vmatprep.subr.bf16.mxu0 0
        %1389 = vmatpush1.bf16.msra.mxu0 0
        %1390 = vmatprep.subr.bf16.mxu0 0
        %1391 = vmatpush1.bf16.msra.mxu0 0
        %1392 = vmatprep.subr.bf16.mxu0 0
        %1393 = vmatpush1.bf16.msra.mxu0 0
        %1394 = vmatprep.subr.bf16.mxu0 0
        %1395 = vmatpush1.bf16.msra.mxu0 0
        %1396 = vmatprep.subr.bf16.mxu0 0
        %1397 = vmatpush1.bf16.msra.mxu0 0
        %1398 = vmatprep.mubr.bf16.mxu0 0
        %1399 = vmatmul.mubr.bf16.gmra.mrb[0].mxu0 %v1364
        %v1400 = vpop.f32.mrb[0].mxu0
        %v1401 = vadd.f32 0.0, %v1400
        %v1402 = vpop.f32.mrb[0].mxu0
        %v1403 = vpop.f32.mrb[0].mxu0
        %v1404 = vadd.f32 0.0, %v1403
        %v1405 = vpop.f32.mrb[0].mxu0
        %1406 = vdwg.mxu0
        %v1407 = vpack.c.bf16 %v1404, %v1401
        %1408 = vrot.lane.b32.xlu0 %v593, 120
        %v1409 = vpop.permute.xlu0 %1408
        %1410 = vrot.lane.b32.xlu0 %v593, 88
        %v1411 = vpop.permute.xlu0 %1410
        %v1413 = vsel %vm608, %v1409, 0
        %v1416 = vsel %vm608, %v1411, 0
        %1418 = vmatprep.subr.bf16.mxu0 0
        %1419 = vmatpush1.bf16.xpose.msra.mxu0 %v1416
        %1420 = vmatprep.subr.bf16.mxu0 0
        %1421 = vmatpush1.bf16.xpose.msra.mxu0 0
        %1422 = vmatprep.subr.bf16.mxu0 0
        %1423 = vmatpush1.bf16.xpose.msra.mxu0 0
        %1424 = vmatprep.subr.bf16.mxu0 0
        %1425 = vmatpush1.bf16.xpose.msra.mxu0 0
        %1426 = vmatprep.subr.bf16.mxu0 0
        %1427 = vmatpush1.bf16.xpose.msra.mxu0 0
        %1428 = vmatprep.subr.bf16.mxu0 0
        %1429 = vmatpush1.bf16.xpose.msra.mxu0 0
        %1430 = vmatprep.subr.bf16.mxu0 0
        %1431 = vmatpush1.bf16.xpose.msra.mxu0 0
        %1432 = vmatprep.subr.bf16.mxu0 0
        %1433 = vmatpush1.bf16.xpose.msra.mxu0 0
        %1434 = vmatprep.subr.bf16.mxu0 0
        %1435 = vmatpush1.bf16.xpose.msra.mxu0 0
        %1436 = vmatprep.subr.bf16.mxu0 0
        %1437 = vmatpush1.bf16.xpose.msra.mxu0 0
        %1438 = vmatprep.subr.bf16.mxu0 0
        %1439 = vmatpush1.bf16.xpose.msra.mxu0 0
        %1440 = vmatprep.subr.bf16.mxu0 0
        %1441 = vmatpush1.bf16.xpose.msra.mxu0 0
        %1442 = vmatprep.subr.bf16.mxu0 0
        %1443 = vmatpush1.bf16.xpose.msra.mxu0 0
        %1444 = vmatprep.subr.bf16.mxu0 0
        %1445 = vmatpush1.bf16.xpose.msra.mxu0 0
        %1446 = vmatprep.subr.bf16.mxu0 0
        %1447 = vmatpush1.bf16.xpose.msra.mxu0 0
        %1448 = vmatprep.subr.bf16.mxu0 0
        %1449 = vmatpush1.bf16.xpose.msra.mxu0 0
        %1450 = vmatprep.mubr.bf16.mxu0 0
        %1451 = vmatmul.mubr.bf16.gmra.mrb[0].mxu0 %v1413
        %v1452 = vpop.f32.mrb[0].mxu0
        %v1453 = vadd.f32 %v599, %v1452
        %v1454 = vpop.f32.mrb[0].mxu0
        %v1455 = vpop.f32.mrb[0].mxu0
        %v1456 = vadd.f32 %v600, %v1455
        %v1457 = vpop.f32.mrb[0].mxu0
        %1458 = vdwg.mxu0
        %v1459 = vsel %vm656, %v1453, -inf
        %1460 = vmax.xlane.f32.xlu0 %v1459
        %v1461 = vpop.xlane.xlu0 %1460
        %v1462 = vsel %vm656, %v1456, -inf
        %1463 = vmax.xlane.f32.xlu0 %v1462
        %v1464 = vpop.xlane.xlu0 %1463
        %v1465 = vsub.f32 %v1453, %v1461
        %v1466 = vsub.f32 %v1456, %v1464
        %v1467 = vmul.f32 %v1465, 1.442695
        %v1468 = vpow.pop %v1467
        %v1469 = vmul.f32 %v1466, 1.442695
        %v1470 = vpow.pop %v1469
        %v1471 = vsel %vm656, %v1468, 0.0
        %1472 = vadd.xlane.f32.xlu0 %v1471
        %v1473 = vpop.xlane.xlu0 %1472
        %v1474 = vsel %vm656, %v1470, 0.0
        %1475 = vadd.xlane.f32.xlu0 %v1474
        %v1476 = vpop.xlane.xlu0 %1475
        %v1477 = vrcp.pop %v1473
        %v1478 = vrcp.pop %v1476
        %v1479 = vmul.f32 %v1468, %v1477
        %v1480 = vmul.f32 %v1470, %v1478
        %v1481 = vpack.c.bf16 %v1480, %v1479
        %1482 = vrot.lane.b32.xlu0 %v593, 56
        %v1483 = vpop.permute.xlu0 %1482
        %v1486 = vsel %vm656, %v1481, 0
        %1488 = vmatprep.subr.bf16.mxu0 0
        %1489 = vmatpush1.bf16.msra.mxu0 %v1483
        %1490 = vmatprep.subr.bf16.mxu0 0
        %1491 = vmatpush1.bf16.msra.mxu0 0
        %1492 = vmatprep.subr.bf16.mxu0 0
        %1493 = vmatpush1.bf16.msra.mxu0 0
        %1494 = vmatprep.subr.bf16.mxu0 0
        %1495 = vmatpush1.bf16.msra.mxu0 0
        %1496 = vmatprep.subr.bf16.mxu0 0
        %1497 = vmatpush1.bf16.msra.mxu0 0
        %1498 = vmatprep.subr.bf16.mxu0 0
        %1499 = vmatpush1.bf16.msra.mxu0 0
        %1500 = vmatprep.subr.bf16.mxu0 0
        %1501 = vmatpush1.bf16.msra.mxu0 0
        %1502 = vmatprep.subr.bf16.mxu0 0
        %1503 = vmatpush1.bf16.msra.mxu0 0
        %1504 = vmatprep.subr.bf16.mxu0 0
        %1505 = vmatpush1.bf16.msra.mxu0 0
        %1506 = vmatprep.subr.bf16.mxu0 0
        %1507 = vmatpush1.bf16.msra.mxu0 0
        %1508 = vmatprep.subr.bf16.mxu0 0
        %1509 = vmatpush1.bf16.msra.mxu0 0
        %1510 = vmatprep.subr.bf16.mxu0 0
        %1511 = vmatpush1.bf16.msra.mxu0 0
        %1512 = vmatprep.subr.bf16.mxu0 0
        %1513 = vmatpush1.bf16.msra.mxu0 0
        %1514 = vmatprep.subr.bf16.mxu0 0
        %1515 = vmatpush1.bf16.msra.mxu0 0
        %1516 = vmatprep.subr.bf16.mxu0 0
        %1517 = vmatpush1.bf16.msra.mxu0 0
        %1518 = vmatprep.subr.bf16.mxu0 0
        %1519 = vmatpush1.bf16.msra.mxu0 0
        %1520 = vmatprep.mubr.bf16.mxu0 0
        %1521 = vmatmul.mubr.bf16.gmra.mrb[0].mxu0 %v1486
        %v1522 = vpop.f32.mrb[0].mxu0
        %v1523 = vadd.f32 0.0, %v1522
        %v1524 = vpop.f32.mrb[0].mxu0
        %v1525 = vpop.f32.mrb[0].mxu0
        %v1526 = vadd.f32 0.0, %v1525
        %v1527 = vpop.f32.mrb[0].mxu0
        %1528 = vdwg.mxu0
        %v1529 = vpack.c.bf16 %v1526, %v1523
        %v1531 = vsel %vm608, %v1529, 0
        %1533 = vmatprep.subr.bf16.mxu0 0
        %1534 = vmatpush1.bf16.msra.mxu0 %v855
        %1535 = vmatprep.subr.bf16.mxu0 0
        %1536 = vmatpush1.bf16.msra.mxu0 0
        %1537 = vmatprep.subr.bf16.mxu0 0
        %1538 = vmatpush1.bf16.msra.mxu0 0
        %1539 = vmatprep.subr.bf16.mxu0 0
        %1540 = vmatpush1.bf16.msra.mxu0 0
        %1541 = vmatprep.subr.bf16.mxu0 0
        %1542 = vmatpush1.bf16.msra.mxu0 0
        %1543 = vmatprep.subr.bf16.mxu0 0
        %1544 = vmatpush1.bf16.msra.mxu0 0
        %1545 = vmatprep.subr.bf16.mxu0 0
        %1546 = vmatpush1.bf16.msra.mxu0 0
        %1547 = vmatprep.subr.bf16.mxu0 0
        %1548 = vmatpush1.bf16.msra.mxu0 0
        %1549 = vmatprep.subr.bf16.mxu0 0
        %1550 = vmatpush1.bf16.msra.mxu0 0
        %1551 = vmatprep.subr.bf16.mxu0 0
        %1552 = vmatpush1.bf16.msra.mxu0 0
        %1553 = vmatprep.subr.bf16.mxu0 0
        %1554 = vmatpush1.bf16.msra.mxu0 0
        %1555 = vmatprep.subr.bf16.mxu0 0
        %1556 = vmatpush1.bf16.msra.mxu0 0
        %1557 = vmatprep.subr.bf16.mxu0 0
        %1558 = vmatpush1.bf16.msra.mxu0 0
        %1559 = vmatprep.subr.bf16.mxu0 0
        %1560 = vmatpush1.bf16.msra.mxu0 0
        %1561 = vmatprep.subr.bf16.mxu0 0
        %1562 = vmatpush1.bf16.msra.mxu0 0
        %1563 = vmatprep.subr.bf16.mxu0 0
        %1564 = vmatpush1.bf16.msra.mxu0 0
        %1565 = vmatprep.mubr.bf16.mxu0 0
        %1566 = vmatmul.mubr.bf16.gmra.mrb[0].mxu0 %v1531
        %v1567 = vpop.f32.mrb[0].mxu0
        %v1568 = vadd.f32 0.0, %v1567
        %v1569 = vpop.f32.mrb[0].mxu0
        %v1570 = vpop.f32.mrb[0].mxu0
        %v1571 = vadd.f32 0.0, %v1570
        %v1572 = vpop.f32.mrb[0].mxu0
        %1573 = vdwg.mxu0
        %v1575 = vsel %vm608, %v1407, 0
        %1577 = vmatprep.subr.bf16.mxu0 0
        %1578 = vmatpush1.bf16.msra.mxu0 %v902
        %1579 = vmatprep.subr.bf16.mxu0 0
        %1580 = vmatpush1.bf16.msra.mxu0 0
        %1581 = vmatprep.subr.bf16.mxu0 0
        %1582 = vmatpush1.bf16.msra.mxu0 0
        %1583 = vmatprep.subr.bf16.mxu0 0
        %1584 = vmatpush1.bf16.msra.mxu0 0
        %1585 = vmatprep.subr.bf16.mxu0 0
        %1586 = vmatpush1.bf16.msra.mxu0 0
        %1587 = vmatprep.subr.bf16.mxu0 0
        %1588 = vmatpush1.bf16.msra.mxu0 0
        %1589 = vmatprep.subr.bf16.mxu0 0
        %1590 = vmatpush1.bf16.msra.mxu0 0
        %1591 = vmatprep.subr.bf16.mxu0 0
        %1592 = vmatpush1.bf16.msra.mxu0 0
        %1593 = vmatprep.subr.bf16.mxu0 0
        %1594 = vmatpush1.bf16.msra.mxu0 0
        %1595 = vmatprep.subr.bf16.mxu0 0
        %1596 = vmatpush1.bf16.msra.mxu0 0
        %1597 = vmatprep.subr.bf16.mxu0 0
        %1598 = vmatpush1.bf16.msra.mxu0 0
        %1599 = vmatprep.subr.bf16.mxu0 0
        %1600 = vmatpush1.bf16.msra.mxu0 0
        %1601 = vmatprep.subr.bf16.mxu0 0
        %1602 = vmatpush1.bf16.msra.mxu0 0
        %1603 = vmatprep.subr.bf16.mxu0 0
        %1604 = vmatpush1.bf16.msra.mxu0 0
        %1605 = vmatprep.subr.bf16.mxu0 0
        %1606 = vmatpush1.bf16.msra.mxu0 0
        %1607 = vmatprep.subr.bf16.mxu0 0
        %1608 = vmatpush1.bf16.msra.mxu0 0
        %1609 = vmatprep.mubr.bf16.mxu0 0
        %1610 = vmatmul.mubr.bf16.gmra.mrb[0].mxu0 %v1575
        %v1611 = vpop.f32.mrb[0].mxu0
        %v1612 = vadd.f32 %v1568, %v1611
        %v1613 = vpop.f32.mrb[0].mxu0
        %v1614 = vpop.f32.mrb[0].mxu0
        %v1615 = vadd.f32 %v1571, %v1614
        %v1616 = vpop.f32.mrb[0].mxu0
        %1617 = vdwg.mxu0
        %1618 = vrot.lane.b32.xlu0 %v593, 112
        %v1619 = vpop.permute.xlu0 %1618
        %1620 = vrot.lane.b32.xlu0 %v593, 80
        %v1621 = vpop.permute.xlu0 %1620
        %v1623 = vsel %vm608, %v1619, 0
        %v1626 = vsel %vm608, %v1621, 0
        %1628 = vmatprep.subr.bf16.mxu0 0
        %1629 = vmatpush1.bf16.xpose.msra.mxu0 %v1626
        %1630 = vmatprep.subr.bf16.mxu0 0
        %1631 = vmatpush1.bf16.xpose.msra.mxu0 0
        %1632 = vmatprep.subr.bf16.mxu0 0
        %1633 = vmatpush1.bf16.xpose.msra.mxu0 0
        %1634 = vmatprep.subr.bf16.mxu0 0
        %1635 = vmatpush1.bf16.xpose.msra.mxu0 0
        %1636 = vmatprep.subr.bf16.mxu0 0
        %1637 = vmatpush1.bf16.xpose.msra.mxu0 0
        %1638 = vmatprep.subr.bf16.mxu0 0
        %1639 = vmatpush1.bf16.xpose.msra.mxu0 0
        %1640 = vmatprep.subr.bf16.mxu0 0
        %1641 = vmatpush1.bf16.xpose.msra.mxu0 0
        %1642 = vmatprep.subr.bf16.mxu0 0
        %1643 = vmatpush1.bf16.xpose.msra.mxu0 0
        %1644 = vmatprep.subr.bf16.mxu0 0
        %1645 = vmatpush1.bf16.xpose.msra.mxu0 0
        %1646 = vmatprep.subr.bf16.mxu0 0
        %1647 = vmatpush1.bf16.xpose.msra.mxu0 0
        %1648 = vmatprep.subr.bf16.mxu0 0
        %1649 = vmatpush1.bf16.xpose.msra.mxu0 0
        %1650 = vmatprep.subr.bf16.mxu0 0
        %1651 = vmatpush1.bf16.xpose.msra.mxu0 0
        %1652 = vmatprep.subr.bf16.mxu0 0
        %1653 = vmatpush1.bf16.xpose.msra.mxu0 0
        %1654 = vmatprep.subr.bf16.mxu0 0
        %1655 = vmatpush1.bf16.xpose.msra.mxu0 0
        %1656 = vmatprep.subr.bf16.mxu0 0
        %1657 = vmatpush1.bf16.xpose.msra.mxu0 0
        %1658 = vmatprep.subr.bf16.mxu0 0
        %1659 = vmatpush1.bf16.xpose.msra.mxu0 0
        %1660 = vmatprep.mubr.bf16.mxu0 0
        %1661 = vmatmul.mubr.bf16.gmra.mrb[0].mxu0 %v1623
        %v1662 = vpop.f32.mrb[0].mxu0
        %v1663 = vadd.f32 %v599, %v1662
        %v1664 = vpop.f32.mrb[0].mxu0
        %v1665 = vpop.f32.mrb[0].mxu0
        %v1666 = vadd.f32 %v600, %v1665
        %v1667 = vpop.f32.mrb[0].mxu0
        %1668 = vdwg.mxu0
        %v1669 = vsel %vm656, %v1663, -inf
        %1670 = vmax.xlane.f32.xlu0 %v1669
        %v1671 = vpop.xlane.xlu0 %1670
        %v1672 = vsel %vm656, %v1666, -inf
        %1673 = vmax.xlane.f32.xlu0 %v1672
        %v1674 = vpop.xlane.xlu0 %1673
        %v1675 = vsub.f32 %v1663, %v1671
        %v1676 = vsub.f32 %v1666, %v1674
        %v1677 = vmul.f32 %v1675, 1.442695
        %v1678 = vpow.pop %v1677
        %v1679 = vmul.f32 %v1676, 1.442695
        %v1680 = vpow.pop %v1679
        %v1681 = vsel %vm656, %v1678, 0.0
        %1682 = vadd.xlane.f32.xlu0 %v1681
        %v1683 = vpop.xlane.xlu0 %1682
        %v1684 = vsel %vm656, %v1680, 0.0
        %1685 = vadd.xlane.f32.xlu0 %v1684
        %v1686 = vpop.xlane.xlu0 %1685
        %v1687 = vrcp.pop %v1683
        %v1688 = vrcp.pop %v1686
        %v1689 = vmul.f32 %v1678, %v1687
        %v1690 = vmul.f32 %v1680, %v1688
        %v1691 = vpack.c.bf16 %v1690, %v1689
        %1692 = vrot.lane.b32.xlu0 %v593, 48
        %v1693 = vpop.permute.xlu0 %1692
        %v1696 = vsel %vm656, %v1691, 0
        %1698 = vmatprep.subr.bf16.mxu0 0
        %1699 = vmatpush1.bf16.msra.mxu0 %v1693
        %1700 = vmatprep.subr.bf16.mxu0 0
        %1701 = vmatpush1.bf16.msra.mxu0 0
        %1702 = vmatprep.subr.bf16.mxu0 0
        %1703 = vmatpush1.bf16.msra.mxu0 0
        %1704 = vmatprep.subr.bf16.mxu0 0
        %1705 = vmatpush1.bf16.msra.mxu0 0
        %1706 = vmatprep.subr.bf16.mxu0 0
        %1707 = vmatpush1.bf16.msra.mxu0 0
        %1708 = vmatprep.subr.bf16.mxu0 0
        %1709 = vmatpush1.bf16.msra.mxu0 0
        %1710 = vmatprep.subr.bf16.mxu0 0
        %1711 = vmatpush1.bf16.msra.mxu0 0
        %1712 = vmatprep.subr.bf16.mxu0 0
        %1713 = vmatpush1.bf16.msra.mxu0 0
        %1714 = vmatprep.subr.bf16.mxu0 0
        %1715 = vmatpush1.bf16.msra.mxu0 0
        %1716 = vmatprep.subr.bf16.mxu0 0
        %1717 = vmatpush1.bf16.msra.mxu0 0
        %1718 = vmatprep.subr.bf16.mxu0 0
        %1719 = vmatpush1.bf16.msra.mxu0 0
        %1720 = vmatprep.subr.bf16.mxu0 0
        %1721 = vmatpush1.bf16.msra.mxu0 0
        %1722 = vmatprep.subr.bf16.mxu0 0
        %1723 = vmatpush1.bf16.msra.mxu0 0
        %1724 = vmatprep.subr.bf16.mxu0 0
        %1725 = vmatpush1.bf16.msra.mxu0 0
        %1726 = vmatprep.subr.bf16.mxu0 0
        %1727 = vmatpush1.bf16.msra.mxu0 0
        %1728 = vmatprep.subr.bf16.mxu0 0
        %1729 = vmatpush1.bf16.msra.mxu0 0
        %1730 = vmatprep.mubr.bf16.mxu0 0
        %1731 = vmatmul.mubr.bf16.gmra.mrb[0].mxu0 %v1696
        %v1732 = vpop.f32.mrb[0].mxu0
        %v1733 = vadd.f32 0.0, %v1732
        %v1734 = vpop.f32.mrb[0].mxu0
        %v1735 = vpop.f32.mrb[0].mxu0
        %v1736 = vadd.f32 0.0, %v1735
        %v1737 = vpop.f32.mrb[0].mxu0
        %1738 = vdwg.mxu0
        %v1739 = vpack.c.bf16 %v1736, %v1733
        %v1741 = vsel %vm608, %v1739, 0
        %1743 = vmatprep.subr.bf16.mxu0 0
        %1744 = vmatpush1.bf16.msra.mxu0 %v1071
        %1745 = vmatprep.subr.bf16.mxu0 0
        %1746 = vmatpush1.bf16.msra.mxu0 0
        %1747 = vmatprep.subr.bf16.mxu0 0
        %1748 = vmatpush1.bf16.msra.mxu0 0
        %1749 = vmatprep.subr.bf16.mxu0 0
        %1750 = vmatpush1.bf16.msra.mxu0 0
        %1751 = vmatprep.subr.bf16.mxu0 0
        %1752 = vmatpush1.bf16.msra.mxu0 0
        %1753 = vmatprep.subr.bf16.mxu0 0
        %1754 = vmatpush1.bf16.msra.mxu0 0
        %1755 = vmatprep.subr.bf16.mxu0 0
        %1756 = vmatpush1.bf16.msra.mxu0 0
        %1757 = vmatprep.subr.bf16.mxu0 0
        %1758 = vmatpush1.bf16.msra.mxu0 0
        %1759 = vmatprep.subr.bf16.mxu0 0
        %1760 = vmatpush1.bf16.msra.mxu0 0
        %1761 = vmatprep.subr.bf16.mxu0 0
        %1762 = vmatpush1.bf16.msra.mxu0 0
        %1763 = vmatprep.subr.bf16.mxu0 0
        %1764 = vmatpush1.bf16.msra.mxu0 0
        %1765 = vmatprep.subr.bf16.mxu0 0
        %1766 = vmatpush1.bf16.msra.mxu0 0
        %1767 = vmatprep.subr.bf16.mxu0 0
        %1768 = vmatpush1.bf16.msra.mxu0 0
        %1769 = vmatprep.subr.bf16.mxu0 0
        %1770 = vmatpush1.bf16.msra.mxu0 0
        %1771 = vmatprep.subr.bf16.mxu0 0
        %1772 = vmatpush1.bf16.msra.mxu0 0
        %1773 = vmatprep.subr.bf16.mxu0 0
        %1774 = vmatpush1.bf16.msra.mxu0 0
        %1775 = vmatprep.mubr.bf16.mxu0 0
        %1776 = vmatmul.mubr.bf16.gmra.mrb[0].mxu0 %v1741
        %v1777 = vpop.f32.mrb[0].mxu0
        %v1778 = vadd.f32 0.0, %v1777
        %v1779 = vpop.f32.mrb[0].mxu0
        %v1780 = vpop.f32.mrb[0].mxu0
        %v1781 = vadd.f32 0.0, %v1780
        %v1782 = vpop.f32.mrb[0].mxu0
        %1783 = vdwg.mxu0
        %v1784 = vadd.f32 %v1612, %v1778
        %v1785 = vadd.f32 %v1615, %v1781
        %1786 = vrot.lane.b32.xlu0 %v593, 104
        %v1787 = vpop.permute.xlu0 %1786
        %1788 = vrot.lane.b32.xlu0 %v593, 72
        %v1789 = vpop.permute.xlu0 %1788
        %v1791 = vsel %vm608, %v1787, 0
        %v1794 = vsel %vm608, %v1789, 0
        %1796 = vmatprep.subr.bf16.mxu0 0
        %1797 = vmatpush1.bf16.xpose.msra.mxu0 %v1794
        %1798 = vmatprep.subr.bf16.mxu0 0
        %1799 = vmatpush1.bf16.xpose.msra.mxu0 0
        %1800 = vmatprep.subr.bf16.mxu0 0
        %1801 = vmatpush1.bf16.xpose.msra.mxu0 0
        %1802 = vmatprep.subr.bf16.mxu0 0
        %1803 = vmatpush1.bf16.xpose.msra.mxu0 0
        %1804 = vmatprep.subr.bf16.mxu0 0
        %1805 = vmatpush1.bf16.xpose.msra.mxu0 0
        %1806 = vmatprep.subr.bf16.mxu0 0
        %1807 = vmatpush1.bf16.xpose.msra.mxu0 0
        %1808 = vmatprep.subr.bf16.mxu0 0
        %1809 = vmatpush1.bf16.xpose.msra.mxu0 0
        %1810 = vmatprep.subr.bf16.mxu0 0
        %1811 = vmatpush1.bf16.xpose.msra.mxu0 0
        %1812 = vmatprep.subr.bf16.mxu0 0
        %1813 = vmatpush1.bf16.xpose.msra.mxu0 0
        %1814 = vmatprep.subr.bf16.mxu0 0
        %1815 = vmatpush1.bf16.xpose.msra.mxu0 0
        %1816 = vmatprep.subr.bf16.mxu0 0
        %1817 = vmatpush1.bf16.xpose.msra.mxu0 0
        %1818 = vmatprep.subr.bf16.mxu0 0
        %1819 = vmatpush1.bf16.xpose.msra.mxu0 0
        %1820 = vmatprep.subr.bf16.mxu0 0
        %1821 = vmatpush1.bf16.xpose.msra.mxu0 0
        %1822 = vmatprep.subr.bf16.mxu0 0
        %1823 = vmatpush1.bf16.xpose.msra.mxu0 0
        %1824 = vmatprep.subr.bf16.mxu0 0
        %1825 = vmatpush1.bf16.xpose.msra.mxu0 0
        %1826 = vmatprep.subr.bf16.mxu0 0
        %1827 = vmatpush1.bf16.xpose.msra.mxu0 0
        %1828 = vmatprep.mubr.bf16.mxu0 0
        %1829 = vmatmul.mubr.bf16.gmra.mrb[0].mxu0 %v1791
        %v1830 = vpop.f32.mrb[0].mxu0
        %v1831 = vadd.f32 %v599, %v1830
        %v1832 = vpop.f32.mrb[0].mxu0
        %v1833 = vpop.f32.mrb[0].mxu0
        %v1834 = vadd.f32 %v600, %v1833
        %v1835 = vpop.f32.mrb[0].mxu0
        %1836 = vdwg.mxu0
        %v1837 = vsel %vm656, %v1831, -inf
        %1838 = vmax.xlane.f32.xlu0 %v1837
        %v1839 = vpop.xlane.xlu0 %1838
        %v1840 = vsel %vm656, %v1834, -inf
        %1841 = vmax.xlane.f32.xlu0 %v1840
        %v1842 = vpop.xlane.xlu0 %1841
        %v1843 = vsub.f32 %v1831, %v1839
        %v1844 = vsub.f32 %v1834, %v1842
        %v1845 = vmul.f32 %v1843, 1.442695
        %v1846 = vpow.pop %v1845
        %v1847 = vmul.f32 %v1844, 1.442695
        %v1848 = vpow.pop %v1847
        %v1849 = vsel %vm656, %v1846, 0.0
        %1850 = vadd.xlane.f32.xlu0 %v1849
        %v1851 = vpop.xlane.xlu0 %1850
        %v1852 = vsel %vm656, %v1848, 0.0
        %1853 = vadd.xlane.f32.xlu0 %v1852
        %v1854 = vpop.xlane.xlu0 %1853
        %v1855 = vrcp.pop %v1851
        %v1856 = vrcp.pop %v1854
        %v1857 = vmul.f32 %v1846, %v1855
        %v1858 = vmul.f32 %v1848, %v1856
        %v1859 = vpack.c.bf16 %v1858, %v1857
        %1860 = vrot.lane.b32.xlu0 %v593, 40
        %v1861 = vpop.permute.xlu0 %1860
        %v1864 = vsel %vm656, %v1859, 0
        %1866 = vmatprep.subr.bf16.mxu0 0
        %1867 = vmatpush1.bf16.msra.mxu0 %v1861
        %1868 = vmatprep.subr.bf16.mxu0 0
        %1869 = vmatpush1.bf16.msra.mxu0 0
        %1870 = vmatprep.subr.bf16.mxu0 0
        %1871 = vmatpush1.bf16.msra.mxu0 0
        %1872 = vmatprep.subr.bf16.mxu0 0
        %1873 = vmatpush1.bf16.msra.mxu0 0
        %1874 = vmatprep.subr.bf16.mxu0 0
        %1875 = vmatpush1.bf16.msra.mxu0 0
        %1876 = vmatprep.subr.bf16.mxu0 0
        %1877 = vmatpush1.bf16.msra.mxu0 0
        %1878 = vmatprep.subr.bf16.mxu0 0
        %1879 = vmatpush1.bf16.msra.mxu0 0
        %1880 = vmatprep.subr.bf16.mxu0 0
        %1881 = vmatpush1.bf16.msra.mxu0 0
        %1882 = vmatprep.subr.bf16.mxu0 0
        %1883 = vmatpush1.bf16.msra.mxu0 0
        %1884 = vmatprep.subr.bf16.mxu0 0
        %1885 = vmatpush1.bf16.msra.mxu0 0
        %1886 = vmatprep.subr.bf16.mxu0 0
        %1887 = vmatpush1.bf16.msra.mxu0 0
        %1888 = vmatprep.subr.bf16.mxu0 0
        %1889 = vmatpush1.bf16.msra.mxu0 0
        %1890 = vmatprep.subr.bf16.mxu0 0
        %1891 = vmatpush1.bf16.msra.mxu0 0
        %1892 = vmatprep.subr.bf16.mxu0 0
        %1893 = vmatpush1.bf16.msra.mxu0 0
        %1894 = vmatprep.subr.bf16.mxu0 0
        %1895 = vmatpush1.bf16.msra.mxu0 0
        %1896 = vmatprep.subr.bf16.mxu0 0
        %1897 = vmatpush1.bf16.msra.mxu0 0
        %1898 = vmatprep.mubr.bf16.mxu0 0
        %1899 = vmatmul.mubr.bf16.gmra.mrb[0].mxu0 %v1864
        %v1900 = vpop.f32.mrb[0].mxu0
        %v1901 = vadd.f32 0.0, %v1900
        %v1902 = vpop.f32.mrb[0].mxu0
        %v1903 = vpop.f32.mrb[0].mxu0
        %v1904 = vadd.f32 0.0, %v1903
        %v1905 = vpop.f32.mrb[0].mxu0
        %1906 = vdwg.mxu0
        %v1907 = vpack.c.bf16 %v1904, %v1901
        %v1909 = vsel %vm608, %v1907, 0
        %1911 = vmatprep.subr.bf16.mxu0 0
        %1912 = vmatpush1.bf16.msra.mxu0 %v1242
        %1913 = vmatprep.subr.bf16.mxu0 0
        %1914 = vmatpush1.bf16.msra.mxu0 0
        %1915 = vmatprep.subr.bf16.mxu0 0
        %1916 = vmatpush1.bf16.msra.mxu0 0
        %1917 = vmatprep.subr.bf16.mxu0 0
        %1918 = vmatpush1.bf16.msra.mxu0 0
        %1919 = vmatprep.subr.bf16.mxu0 0
        %1920 = vmatpush1.bf16.msra.mxu0 0
        %1921 = vmatprep.subr.bf16.mxu0 0
        %1922 = vmatpush1.bf16.msra.mxu0 0
        %1923 = vmatprep.subr.bf16.mxu0 0
        %1924 = vmatpush1.bf16.msra.mxu0 0
        %1925 = vmatprep.subr.bf16.mxu0 0
        %1926 = vmatpush1.bf16.msra.mxu0 0
        %1927 = vmatprep.subr.bf16.mxu0 0
        %1928 = vmatpush1.bf16.msra.mxu0 0
        %1929 = vmatprep.subr.bf16.mxu0 0
        %1930 = vmatpush1.bf16.msra.mxu0 0
        %1931 = vmatprep.subr.bf16.mxu0 0
        %1932 = vmatpush1.bf16.msra.mxu0 0
        %1933 = vmatprep.subr.bf16.mxu0 0
        %1934 = vmatpush1.bf16.msra.mxu0 0
        %1935 = vmatprep.subr.bf16.mxu0 0
        %1936 = vmatpush1.bf16.msra.mxu0 0
        %1937 = vmatprep.subr.bf16.mxu0 0
        %1938 = vmatpush1.bf16.msra.mxu0 0
        %1939 = vmatprep.subr.bf16.mxu0 0
        %1940 = vmatpush1.bf16.msra.mxu0 0
        %1941 = vmatprep.subr.bf16.mxu0 0
        %1942 = vmatpush1.bf16.msra.mxu0 0
        %1943 = vmatprep.mubr.bf16.mxu0 0
        %1944 = vmatmul.mubr.bf16.gmra.mrb[0].mxu0 %v1909
        %v1945 = vpop.f32.mrb[0].mxu0
        %v1946 = vadd.f32 0.0, %v1945
        %v1947 = vpop.f32.mrb[0].mxu0
        %v1948 = vpop.f32.mrb[0].mxu0
        %v1949 = vadd.f32 0.0, %v1948
        %v1950 = vpop.f32.mrb[0].mxu0
        %1951 = vdwg.mxu0
        %v1952 = vadd.f32 %v1784, %v1946
        %v1953 = vadd.f32 %v1785, %v1949
        %v1954 = vlaneseq
        %v1955 = vshrl.u32 %v1954, 7
        %v1956 = vsub.s32 1, %v1955
        %v1957 = vrot.slane %v469, %v1956
        %v1958 = vadd.f32 %v1285, %v1957
        %v1959 = vadd.f32 %v1286, %v1957
        %v1960 = vadd.f32 %v1952, %v1957
        %v1961 = vadd.f32 %v1953, %v1957
        %v1962 = vadd.f32 %v1958, %v465
        %v1963 = vadd.f32 %v1959, %v466
        %v1964 = vadd.f32 %v1960, %v467
        %v1965 = vadd.f32 %v1961, %v468
        %1966 = vadd.xlane.f32.xlu0 %v1962
        %v1967 = vpop.xlane.xlu0 %1966
        %1968 = vadd.xlane.f32.xlu0 %v1963
        %v1969 = vpop.xlane.xlu0 %1968
        %1970 = vadd.xlane.f32.xlu0 %v1964
        %v1971 = vpop.xlane.xlu0 %1970
        %1972 = vadd.xlane.f32.xlu0 %v1965
        %v1973 = vpop.xlane.xlu0 %1972
        %v1974 = vmul.f32 %v1967, 0.03125
        %v1975 = vmul.f32 %v1969, 0.03125
        %v1976 = vmul.f32 %v1971, 0.03125
        %v1977 = vmul.f32 %v1973, 0.03125
        %v1978 = vsub.f32 %v1962, %v1974
        %v1979 = vsub.f32 %v1963, %v1975
        %v1980 = vsub.f32 %v1964, %v1976
        %v1981 = vsub.f32 %v1965, %v1977
        %v1982 = vsel %vm472, %v1978, 0.0
        %v1983 = vsel %vm472, %v1979, 0.0
        %v1984 = vsel %vm472, %v1980, 0.0
        %v1985 = vsel %vm472, %v1981, 0.0
        %v1986 = vmul.f32 %v1982, %v1982
        %v1987 = vmul.f32 %v1983, %v1983
        %v1988 = vmul.f32 %v1984, %v1984
        %v1989 = vmul.f32 %v1985, %v1985
        %1990 = vadd.xlane.f32.xlu0 %v1986
        %v1991 = vpop.xlane.xlu0 %1990
        %1992 = vadd.xlane.f32.xlu0 %v1987
        %v1993 = vpop.xlane.xlu0 %1992
        %1994 = vadd.xlane.f32.xlu0 %v1988
        %v1995 = vpop.xlane.xlu0 %1994
        %1996 = vadd.xlane.f32.xlu0 %v1989
        %v1997 = vpop.xlane.xlu0 %1996
        %v1998 = vmul.f32 %v1991, 0.03125
        %v1999 = vmul.f32 %v1993, 0.03125
        %v2000 = vmul.f32 %v1995, 0.03125
        %v2001 = vmul.f32 %v1997, 0.03125
        %v2002 = vadd.f32 %v1998, 1e-12
        %v2003 = vadd.f32 %v1999, 1e-12
        %v2004 = vadd.f32 %v2000, 1e-12
        %v2005 = vadd.f32 %v2001, 1e-12
        %v2006 = vrsqrt.pop %v2002
        %v2007 = vrsqrt.pop %v2003
        %v2008 = vrsqrt.pop %v2004
        %v2009 = vrsqrt.pop %v2005
        %v2010 = vmul.f32 %v1982, %v2006
        %v2011 = vmul.f32 %v1983, %v2007
        %v2012 = vmul.f32 %v1984, %v2008
        %v2013 = vmul.f32 %v1985, %v2009
        %v2014 = vlaneseq
        %v2015 = vshrl.u32 %v2014, 7
        %v2016 = vsub.s32 2, %v2015
        %v2017 = vrot.slane %v469, %v2016
        %v2018 = vmul.f32 %v2010, %v2017
        %v2019 = vmul.f32 %v2011, %v2017
        %v2020 = vmul.f32 %v2012, %v2017
        %v2021 = vmul.f32 %v2013, %v2017
        %v2022 = vlaneseq
        %v2023 = vshrl.u32 %v2022, 7
        %v2024 = vsub.s32 3, %v2023
        %v2025 = vrot.slane %v469, %v2024
        %v2026 = vadd.f32 %v2018, %v2025
        %v2027 = vadd.f32 %v2019, %v2025
        %v2028 = vadd.f32 %v2020, %v2025
        %v2029 = vadd.f32 %v2021, %v2025
        %v2030 = vpack.c.bf16 %v2027, %v2026
        %v2031 = vpack.c.bf16 %v2029, %v2028
        %v2032 = vld [vmem:[%s388] sm:$0xf]
        %v2033 = vld [vmem:[%s388 + $0x4] sm:$0xf]
        %v2034 = vld [vmem:[%s388 + $0x8] sm:$0xf]
        %v2035 = vld [vmem:[%s388 + $0xc] sm:$0xf]
        %v2036 = vld [vmem:[%s388 + $0x10] sm:$0xf]
        %v2037 = vld [vmem:[%s388 + $0x14] sm:$0xf]
        %v2038 = vld [vmem:[%s388 + $0x18] sm:$0xf]
        %v2039 = vld [vmem:[%s388 + $0x1c] sm:$0xf]
        %v2040 = vld [vmem:[%s388 + $0x20] sm:$0xf]
        %v2041 = vld [vmem:[%s388 + $0x24] sm:$0xf]
        %v2042 = vld [vmem:[%s388 + $0x28] sm:$0xf]
        %v2043 = vld [vmem:[%s388 + $0x2c] sm:$0xf]
        %v2044 = vld [vmem:[%s388 + $0x30] sm:$0xf]
        %v2045 = vld [vmem:[%s388 + $0x34] sm:$0xf]
        %v2046 = vld [vmem:[%s388 + $0x38] sm:$0xf]
        %v2047 = vld [vmem:[%s388 + $0x3c] sm:$0xf]
        %v2048 = vlaneseq
        %v2049 = vshrl.u32 %v2048, 7
        %v2050 = vsub.s32 4, %v2049
        %v2051 = vrot.slane %v469, %v2050
        %v2068 = vunpack.c.l.b16 %v2032
        %v2069 = vunpack.c.l.b16 %v2033
        %v2070 = vunpack.c.l.b16 %v2034
        %v2071 = vunpack.c.l.b16 %v2035
        %v2072 = vunpack.c.l.b16 %v2036
        %v2073 = vunpack.c.l.b16 %v2037
        %v2074 = vunpack.c.l.b16 %v2038
        %v2075 = vunpack.c.l.b16 %v2039
        %v2076 = vunpack.c.l.b16 %v2040
        %v2077 = vunpack.c.l.b16 %v2041
        %v2078 = vunpack.c.l.b16 %v2042
        %v2079 = vunpack.c.l.b16 %v2043
        %v2080 = vunpack.c.l.b16 %v2044
        %v2081 = vunpack.c.l.b16 %v2045
        %v2082 = vunpack.c.l.b16 %v2046
        %v2083 = vunpack.c.l.b16 %v2047
        %v2084 = vpack.c.b16 %v2069, %v2068
        %v2085 = vpack.c.b16 %v2071, %v2070
        %v2086 = vpack.c.b16 %v2073, %v2072
        %v2087 = vpack.c.b16 %v2075, %v2074
        %v2088 = vpack.c.b16 %v2077, %v2076
        %v2089 = vpack.c.b16 %v2079, %v2078
        %v2090 = vpack.c.b16 %v2081, %v2080
        %v2091 = vpack.c.b16 %v2083, %v2082
        %2100 = vmatprep.subr.bf16.mxu0 0
        %2101 = vmatpush1.bf16.msra.mxu0 %v2084
        %2102 = vmatprep.subr.bf16.mxu0 0
        %2103 = vmatpush1.bf16.msra.mxu0 %v2085
        %2104 = vmatprep.subr.bf16.mxu0 0
        %2105 = vmatpush1.bf16.msra.mxu0 %v2086
        %2106 = vmatprep.subr.bf16.mxu0 0
        %2107 = vmatpush1.bf16.msra.mxu0 %v2087
        %2108 = vmatprep.subr.bf16.mxu0 0
        %2109 = vmatpush1.bf16.msra.mxu0 %v2088
        %2110 = vmatprep.subr.bf16.mxu0 0
        %2111 = vmatpush1.bf16.msra.mxu0 %v2089
        %2112 = vmatprep.subr.bf16.mxu0 0
        %2113 = vmatpush1.bf16.msra.mxu0 %v2090
        %2114 = vmatprep.subr.bf16.mxu0 0
        %2115 = vmatpush1.bf16.msra.mxu0 %v2091
        %2116 = vmatprep.subr.bf16.mxu0 0
        %2117 = vmatpush1.bf16.msra.mxu0 0
        %2118 = vmatprep.subr.bf16.mxu0 0
        %2119 = vmatpush1.bf16.msra.mxu0 0
        %2120 = vmatprep.subr.bf16.mxu0 0
        %2121 = vmatpush1.bf16.msra.mxu0 0
        %2122 = vmatprep.subr.bf16.mxu0 0
        %2123 = vmatpush1.bf16.msra.mxu0 0
        %2124 = vmatprep.subr.bf16.mxu0 0
        %2125 = vmatpush1.bf16.msra.mxu0 0
        %2126 = vmatprep.subr.bf16.mxu0 0
        %2127 = vmatpush1.bf16.msra.mxu0 0
        %2128 = vmatprep.subr.bf16.mxu0 0
        %2129 = vmatpush1.bf16.msra.mxu0 0
        %2130 = vmatprep.subr.bf16.mxu0 0
        %2131 = vmatpush1.bf16.msra.mxu0 0
        %2132 = vmatprep.mubr.bf16.mxu0 0
        %2133 = vmatmul.mubr.bf16.gmra.mrb[0].mxu0 %v2030
        %v2134 = vpop.f32.mrb[0].mxu0
        %v2135 = vadd.f32 %v2051, %v2134
        %v2136 = vpop.f32.mrb[0].mxu0
        %v2137 = vpop.f32.mrb[0].mxu0
        %v2138 = vadd.f32 %v2051, %v2137
        %v2139 = vpop.f32.mrb[0].mxu0
        %2140 = vmatprep.mubr.bf16.mxu0 0
        %2141 = vmatmul.mubr.bf16.gmra.mrb[0].mxu0 %v2031
        %v2142 = vpop.f32.mrb[0].mxu0
        %v2143 = vadd.f32 %v2051, %v2142
        %v2144 = vpop.f32.mrb[0].mxu0
        %v2145 = vpop.f32.mrb[0].mxu0
        %v2146 = vadd.f32 %v2051, %v2145
        %v2147 = vpop.f32.mrb[0].mxu0
        %2148 = vdwg.mxu0
        %v2149 = vmul.f32 %v2135, 0.5
        %v2150 = vmul.f32 %v2138, 0.5
        %v2151 = vmul.f32 %v2143, 0.5
        %v2152 = vmul.f32 %v2146, 0.5
        %v2153 = vmul.f32 %v2135, 0.044715
        %v2154 = vmul.f32 %v2138, 0.044715
        %v2155 = vmul.f32 %v2143, 0.044715
        %v2156 = vmul.f32 %v2146, 0.044715
        %v2157 = vmul.f32 %v2153, %v2135
        %v2158 = vmul.f32 %v2154, %v2138
        %v2159 = vmul.f32 %v2155, %v2143
        %v2160 = vmul.f32 %v2156, %v2146
        %v2161 = vmul.f32 %v2157, %v2135
        %v2162 = vmul.f32 %v2158, %v2138
        %v2163 = vmul.f32 %v2159, %v2143
        %v2164 = vmul.f32 %v2160, %v2146
        %v2165 = vadd.f32 %v2135, %v2161
        %v2166 = vadd.f32 %v2138, %v2162
        %v2167 = vadd.f32 %v2143, %v2163
        %v2168 = vadd.f32 %v2146, %v2164
        %v2169 = vmul.f32 %v2165, 0.7978846
        %v2170 = vmul.f32 %v2166, 0.7978846
        %v2171 = vmul.f32 %v2167, 0.7978846
        %v2172 = vmul.f32 %v2168, 0.7978846
        %v2173 = vtanh.pop %v2169
        %v2174 = vtanh.pop %v2170
        %v2175 = vtanh.pop %v2171
        %v2176 = vtanh.pop %v2172
        %v2177 = vadd.f32 %v2173, 1.0
        %v2178 = vadd.f32 %v2174, 1.0
        %v2179 = vadd.f32 %v2175, 1.0
        %v2180 = vadd.f32 %v2176, 1.0
        %v2181 = vmul.f32 %v2149, %v2177
        %v2182 = vmul.f32 %v2150, %v2178
        %v2183 = vmul.f32 %v2151, %v2179
        %v2184 = vmul.f32 %v2152, %v2180
        %v2185 = vpack.c.bf16 %v2182, %v2181
        %v2186 = vpack.c.bf16 %v2184, %v2183
        %v2187 = vld [vmem:[%s397] sm:$0xf]
        %v2188 = vld [vmem:[%s397 + $0x4] sm:$0xf]
        %v2189 = vld [vmem:[%s397 + $0x8] sm:$0xf]
        %v2190 = vld [vmem:[%s397 + $0xc] sm:$0xf]
        %v2191 = vld [vmem:[%s397 + $0x10] sm:$0xf]
        %v2192 = vld [vmem:[%s397 + $0x14] sm:$0xf]
        %v2193 = vld [vmem:[%s397 + $0x18] sm:$0xf]
        %v2194 = vld [vmem:[%s397 + $0x1c] sm:$0xf]
        %v2195 = vld [vmem:[%s397 + $0x20] sm:$0xf]
        %v2196 = vld [vmem:[%s397 + $0x24] sm:$0xf]
        %v2197 = vld [vmem:[%s397 + $0x28] sm:$0xf]
        %v2198 = vld [vmem:[%s397 + $0x2c] sm:$0xf]
        %v2199 = vld [vmem:[%s397 + $0x30] sm:$0xf]
        %v2200 = vld [vmem:[%s397 + $0x34] sm:$0xf]
        %v2201 = vld [vmem:[%s397 + $0x38] sm:$0xf]
        %v2202 = vld [vmem:[%s397 + $0x3c] sm:$0xf]
        %v2203 = vlaneseq
        %v2204 = vshrl.u32 %v2203, 7
        %v2205 = vsub.s32 5, %v2204
        %v2206 = vrot.slane %v469, %v2205
        %v2223 = vunpack.c.l.b16 %v2187
        %v2224 = vunpack.c.l.b16 %v2188
        %v2225 = vunpack.c.l.b16 %v2189
        %v2226 = vunpack.c.l.b16 %v2190
        %v2227 = vunpack.c.l.b16 %v2191
        %v2228 = vunpack.c.l.b16 %v2192
        %v2229 = vunpack.c.l.b16 %v2193
        %v2230 = vunpack.c.l.b16 %v2194
        %v2231 = vunpack.c.l.b16 %v2195
        %v2232 = vunpack.c.l.b16 %v2196
        %v2233 = vunpack.c.l.b16 %v2197
        %v2234 = vunpack.c.l.b16 %v2198
        %v2235 = vunpack.c.l.b16 %v2199
        %v2236 = vunpack.c.l.b16 %v2200
        %v2237 = vunpack.c.l.b16 %v2201
        %v2238 = vunpack.c.l.b16 %v2202
        %v2239 = vpack.c.b16 %v2224, %v2223
        %v2240 = vpack.c.b16 %v2226, %v2225
        %v2241 = vpack.c.b16 %v2228, %v2227
        %v2242 = vpack.c.b16 %v2230, %v2229
        %v2243 = vpack.c.b16 %v2232, %v2231
        %v2244 = vpack.c.b16 %v2234, %v2233
        %v2245 = vpack.c.b16 %v2236, %v2235
        %v2246 = vpack.c.b16 %v2238, %v2237
        %2255 = vmatprep.subr.bf16.mxu0 0
        %2256 = vmatpush1.bf16.msra.mxu0 %v2239
        %2257 = vmatprep.subr.bf16.mxu0 0
        %2258 = vmatpush1.bf16.msra.mxu0 %v2240
        %2259 = vmatprep.subr.bf16.mxu0 0
        %2260 = vmatpush1.bf16.msra.mxu0 %v2241
        %2261 = vmatprep.subr.bf16.mxu0 0
        %2262 = vmatpush1.bf16.msra.mxu0 %v2242
        %2263 = vmatprep.subr.bf16.mxu0 0
        %2264 = vmatpush1.bf16.msra.mxu0 %v2243
        %2265 = vmatprep.subr.bf16.mxu0 0
        %2266 = vmatpush1.bf16.msra.mxu0 %v2244
        %2267 = vmatprep.subr.bf16.mxu0 0
        %2268 = vmatpush1.bf16.msra.mxu0 %v2245
        %2269 = vmatprep.subr.bf16.mxu0 0
        %2270 = vmatpush1.bf16.msra.mxu0 %v2246
        %2271 = vmatprep.subr.bf16.mxu0 0
        %2272 = vmatpush1.bf16.msra.mxu0 0
        %2273 = vmatprep.subr.bf16.mxu0 0
        %2274 = vmatpush1.bf16.msra.mxu0 0
        %2275 = vmatprep.subr.bf16.mxu0 0
        %2276 = vmatpush1.bf16.msra.mxu0 0
        %2277 = vmatprep.subr.bf16.mxu0 0
        %2278 = vmatpush1.bf16.msra.mxu0 0
        %2279 = vmatprep.subr.bf16.mxu0 0
        %2280 = vmatpush1.bf16.msra.mxu0 0
        %2281 = vmatprep.subr.bf16.mxu0 0
        %2282 = vmatpush1.bf16.msra.mxu0 0
        %2283 = vmatprep.subr.bf16.mxu0 0
        %2284 = vmatpush1.bf16.msra.mxu0 0
        %2285 = vmatprep.subr.bf16.mxu0 0
        %2286 = vmatpush1.bf16.msra.mxu0 0
        %2287 = vmatprep.mubr.bf16.mxu0 0
        %2288 = vmatmul.mubr.bf16.gmra.mrb[0].mxu0 %v2185
        %v2289 = vpop.f32.mrb[0].mxu0
        %v2290 = vadd.f32 %v2206, %v2289
        %v2291 = vpop.f32.mrb[0].mxu0
        %v2292 = vpop.f32.mrb[0].mxu0
        %v2293 = vadd.f32 %v2206, %v2292
        %v2294 = vpop.f32.mrb[0].mxu0
        %2295 = vmatprep.mubr.bf16.mxu0 0
        %2296 = vmatmul.mubr.bf16.gmra.mrb[0].mxu0 %v2186
        %v2297 = vpop.f32.mrb[0].mxu0
        %v2298 = vadd.f32 %v2206, %v2297
        %v2299 = vpop.f32.mrb[0].mxu0
        %v2300 = vpop.f32.mrb[0].mxu0
        %v2301 = vadd.f32 %v2206, %v2300
        %v2302 = vpop.f32.mrb[0].mxu0
        %2303 = vdwg.mxu0
        %v2304 = vadd.f32 %v2290, %v2026
        %v2305 = vadd.f32 %v2293, %v2027
        %v2306 = vadd.f32 %v2298, %v2028
        %v2307 = vadd.f32 %v2301, %v2029
        %2308 = vadd.xlane.f32.xlu0 %v2304
        %v2309 = vpop.xlane.xlu0 %2308
        %2310 = vadd.xlane.f32.xlu0 %v2305
        %v2311 = vpop.xlane.xlu0 %2310
        %2312 = vadd.xlane.f32.xlu0 %v2306
        %v2313 = vpop.xlane.xlu0 %2312
        %2314 = vadd.xlane.f32.xlu0 %v2307
        %v2315 = vpop.xlane.xlu0 %2314
        %v2316 = vmul.f32 %v2309, 0.03125
        %v2317 = vmul.f32 %v2311, 0.03125
        %v2318 = vmul.f32 %v2313, 0.03125
        %v2319 = vmul.f32 %v2315, 0.03125
        %v2320 = vsub.f32 %v2304, %v2316
        %v2321 = vsub.f32 %v2305, %v2317
        %v2322 = vsub.f32 %v2306, %v2318
        %v2323 = vsub.f32 %v2307, %v2319
        %v2324 = vsel %vm472, %v2320, 0.0
        %v2325 = vsel %vm472, %v2321, 0.0
        %v2326 = vsel %vm472, %v2322, 0.0
        %v2327 = vsel %vm472, %v2323, 0.0
        %v2328 = vmul.f32 %v2324, %v2324
        %v2329 = vmul.f32 %v2325, %v2325
        %v2330 = vmul.f32 %v2326, %v2326
        %v2331 = vmul.f32 %v2327, %v2327
        %2332 = vadd.xlane.f32.xlu0 %v2328
        %v2333 = vpop.xlane.xlu0 %2332
        %2334 = vadd.xlane.f32.xlu0 %v2329
        %v2335 = vpop.xlane.xlu0 %2334
        %2336 = vadd.xlane.f32.xlu0 %v2330
        %v2337 = vpop.xlane.xlu0 %2336
        %2338 = vadd.xlane.f32.xlu0 %v2331
        %v2339 = vpop.xlane.xlu0 %2338
        %v2340 = vmul.f32 %v2333, 0.03125
        %v2341 = vmul.f32 %v2335, 0.03125
        %v2342 = vmul.f32 %v2337, 0.03125
        %v2343 = vmul.f32 %v2339, 0.03125
        %v2344 = vadd.f32 %v2340, 1e-12
        %v2345 = vadd.f32 %v2341, 1e-12
        %v2346 = vadd.f32 %v2342, 1e-12
        %v2347 = vadd.f32 %v2343, 1e-12
        %v2348 = vrsqrt.pop %v2344
        %v2349 = vrsqrt.pop %v2345
        %v2350 = vrsqrt.pop %v2346
        %v2351 = vrsqrt.pop %v2347
        %v2352 = vmul.f32 %v2324, %v2348
        %v2353 = vmul.f32 %v2325, %v2349
        %v2354 = vmul.f32 %v2326, %v2350
        %v2355 = vmul.f32 %v2327, %v2351
        %v2356 = vlaneseq
        %v2357 = vshrl.u32 %v2356, 7
        %v2358 = vsub.s32 6, %v2357
        %v2359 = vrot.slane %v469, %v2358
        %v2360 = vmul.f32 %v2352, %v2359
        %v2361 = vmul.f32 %v2353, %v2359
        %v2362 = vmul.f32 %v2354, %v2359
        %v2363 = vmul.f32 %v2355, %v2359
        %v2364 = vlaneseq
        %v2365 = vshrl.u32 %v2364, 7
        %v2366 = vsub.s32 7, %v2365
        %v2367 = vrot.slane %v469, %v2366
        %v2368 = vadd.f32 %v2360, %v2367
        %v2369 = vadd.f32 %v2361, %v2367
        %v2370 = vadd.f32 %v2362, %v2367
        %v2371 = vadd.f32 %v2363, %v2367
        %2372 = vst [vmem:[#allocation13] sm:$0xff] %v2368
        %2373 = vst [vmem:[#allocation13 + $0x8] sm:$0xff] %v2369
        %2374 = vst [vmem:[#allocation13 + $0x10] sm:$0xff] %v2370
        %2375 = vst [vmem:[#allocation13 + $0x18] sm:$0xff] %v2371
        // Predicated region
        $region73: #{tpu_custom_call.1} parent=43 // pred_check
          %p2376 = pneg %p214
        $region74: #{tpu_custom_call.1} parent=43 // pred_check_branch
          %2378 = sbr.rel (%p2376) target = $region76
        $region75: #{tpu_custom_call.1} parent=43 // pred_region
          %s2379 = smul.u32 2, %s32
          %s2381 = ssub.s32 512, 512
          %2382 = vsyncadd [#allocation4], %s2381
          %s2383 = smul.addr %s2379, 2
          %s2384 = smul.addr %s2383, 128
          %s2385 = scalar_lea.hbm %s6, %s2384
          %s2386 = sshll.u32 [#allocation13], 4
          %s2387 = int_to_ptr.vmem [resolvable:$true] %s2386
          %2392 = dma.vmem_to_hbm [thread:$0]  %s2387, 512, %s2385, [#allocation4], 128, 128, 8
        $region76: #{tpu_custom_call.1} parent=43 // pred_fallthru
          _
        // Predicated region
        $region77: #{tpu_custom_call.1} parent=43 // pred_check
          %p2393 = pneg %p214
        $region78: #{tpu_custom_call.1} parent=43 // pred_check_branch
          %2395 = sbr.rel (%p2393) target = $region80
        $region79: #{tpu_custom_call.1} parent=43 // pred_region
          %2396 = dma.done [#allocation4], 512
        $region80: #{tpu_custom_call.1} parent=43 // pred_fallthru
          _
      $region44: #{tpu_custom_call.1} parent=5 // pred_fallthru
        _
      %p2397 = scmp.le.s32.totalorder 2, %s23
      // Predicated region
      $region81: #{tpu_custom_call.1} parent=5 // pred_check
        %p2398 = pneg %p2397
      $region82: #{tpu_custom_call.1} parent=5 // pred_check_branch
        %2400 = sbr.rel (%p2398) target = $region84
      $region83: #{tpu_custom_call.1} parent=5 // pred_region
        %s2401 = ssub.s32 %s23, 2
      $region84: #{tpu_custom_call.1} parent=5 // pred_fallthru
        _
    $region6: #{tpu_custom_call.1} parent=1 // loop_footer
      %s27 = sadd.s32 1, %s23
    $region7: #{tpu_custom_call.1} parent=1 // loop_footer_branch
      %22 = sbr.rel target = $region3
    $region8: #{tpu_custom_call.1} parent=1 // loop_exit
      _
    %2402 = vsyncpa [#allocation3], 1
    %s2403 = scalar_lea.sflag [#allocation3], 1
    %2404 = vsyncpa %s2403, 1
    %2405 = vsyncpa [#allocation6], 1
    %s2406 = scalar_lea.sflag [#allocation6], 1
    %2407 = vsyncpa %s2406, 1
    %2408 = vsyncpa [#allocation9], 1
    %s2409 = scalar_lea.sflag [#allocation9], 1
    %2410 = vsyncpa %s2409, 1
    %2411 = vsyncpa [#allocation12], 1
    %s2412 = scalar_lea.sflag [#allocation12], 1
    %2413 = vsyncpa %s2412, 1
    %2414 = vsyncpa [#allocation4], 1
    %s2415 = scalar_lea.sflag [#allocation4], 1
    %2416 = vsyncpa %s2415, 1

</llo_original>
